<compile_context>
chip_gen: v5e
topology: v5e:2x2
jax: 0.10.0
libtpu: 0.0.40
codegen_flags: <defaults>
</compile_context>

<pallas_src>
import jax
import jax.numpy as jnp
from jax.experimental import pallas as pl
from jax.experimental.pallas import tpu as pltpu


OUT_SLAB_LANES = 128  # lane-dense fused output width (logits in [:O], ht at [O])


def _round_up(x, m):
    return ((x + m - 1) // m) * m


# --------------------------- fused Encoder kernel ----------------------------

def _make_encoder_kernel(num_layers, b_pad, seq_len, h_pads):
    """h_pads: per-layer padded hidden size (4*h_pad is lane-dense, i.e. %128==0)."""
    T, Bp = seq_len, b_pad

    def kernel(*refs):
        n_in = 1 + 3 * num_layers + 2
        x_ref = refs[0]                          # (T*Bp, F) f32, time-major
        w_refs = refs[1:1 + 3 * num_layers]      # per layer: wih_t bf16, whh_t bf16, b f32
        wout_ref = refs[1 + 3 * num_layers]      # (Hp_last, 128) bf16 (incl. ht column)
        bout_ref = refs[2 + 3 * num_layers]      # (1, 128) f32
        out_ref = refs[n_in]                     # (Bp, 128) f32 fused output slab
        gates_ref = refs[n_in + 1]               # VMEM (T*Bp, max 4Hp) f32
        seq_refs = refs[n_in + 2:]               # VMEM (T*Bp, Hp_l) f32 for l < L-1

        cur = x_ref[...].astype(jnp.bfloat16)    # bf16 MXU operand
        h = None
        for l in range(num_layers):
            Hp = h_pads[l]
            G = 4 * Hp
            wih = w_refs[3 * l][...]             # (in_pad, G) bf16
            whh = w_refs[3 * l + 1][...]         # (Hp, G)    bf16
            b = w_refs[3 * l + 2][...]           # (1, G)     f32

            # Hoisted input projection for the whole sequence -> VMEM scratch
            # (keeps the unrolled time loop's vreg working set small).
            gx = jnp.dot(cur, wih, preferred_element_type=jnp.float32) + b
            if G == gates_ref.shape[1]:
                gates_ref[...] = gx
            else:
                gates_ref[:, :G] = gx

            h = jnp.zeros((Bp, Hp), jnp.float32)
            c = jnp.zeros((Bp, Hp), jnp.float32)
            for t in range(T):                   # static unroll (T is small & fixed)
                if G == gates_ref.shape[1]:
                    g_x = gates_ref[pl.ds(t * Bp, Bp), :]
                else:
                    g_x = gates_ref[pl.ds(t * Bp, Bp), :G]
                g = g_x + jnp.dot(h.astype(jnp.bfloat16), whh,
                                  preferred_element_type=jnp.float32)
                # Gate layout is (i, f, o, g): sigmoid on the first 3 bands,
                # tanh only on the last band.
                sig = jax.nn.sigmoid(g[:, :3 * Hp])
                g_g = jnp.tanh(g[:, 3 * Hp:])
                i_g = sig[:, 0 * Hp:1 * Hp]
                f_g = sig[:, 1 * Hp:2 * Hp]
                o_g = sig[:, 2 * Hp:3 * Hp]
                c = f_g * c + i_g * g_g
                h = o_g * jnp.tanh(c)
                if l < num_layers - 1:
                    seq_refs[l][pl.ds(t * Bp, Bp), :] = h
            if l < num_layers - 1:
                cur = seq_refs[l][...].astype(jnp.bfloat16)

        # Fused head: logits in columns [:O], ht (= h[:, H_real-1]) in column O
        # via an identity column baked into wout; single lane-dense store.
        out_ref[...] = (
            jnp.dot(h.astype(jnp.bfloat16), wout_ref[...],
                    preferred_element_type=jnp.float32)
            + bout_ref[...]
        )

    return kernel


def _full_vmem_spec(shape):
    zeros = (0,) * len(shape)
    return pl.BlockSpec(shape, lambda zeros=zeros: zeros)


# ------------------------- kernel-side weight packing -------------------------

def _pack_params_for_kernel(params, n_features):
    """PyTorch-layout params -> kernel operands.

    Per LSTM layer: gate rows reordered (i,f,g,o)->(i,f,o,g), transposed to
    (in, 4H), hidden size zero-padded to a multiple of 32 (so 4*Hp % 128 == 0),
    biases fused, weights cast to bf16.  Output head packed into a lane-dense
    (Hp_last, 128) slab that also carries the ht-extraction identity column.
    """
    layers = list(params["lstm_enc"]) + list(params["lstm1"])
    packed, h_pads = [], []
    in_real, in_pad = n_features, n_features
    for lp in layers:
        H = lp["whh"].shape[1]
        Hp = _round_up(H, 32)

        def reorder(w, H=H):  # rows/elements (i,f,g,o) -> (i,f,o,g)
            return jnp.concatenate(
                [w[0:H], w[H:2 * H], w[3 * H:4 * H], w[2 * H:3 * H]], axis=0)

        wih_t = reorder(lp["wih"]).T                      # (in_real, 4H)
        whh_t = reorder(lp["whh"]).T                      # (H, 4H)
        b_fused = reorder(lp["b_ih"] + lp["b_hh"])        # (4H,)

        wih_pad = jnp.zeros((in_pad, 4 * Hp), jnp.float32)
        whh_pad = jnp.zeros((Hp, 4 * Hp), jnp.float32)
        b_pad = jnp.zeros((1, 4 * Hp), jnp.float32)
        for band in range(4):
            wih_pad = wih_pad.at[:in_real, band * Hp:band * Hp + H].set(
                wih_t[:, band * H:(band + 1) * H])
            whh_pad = whh_pad.at[:H, band * Hp:band * Hp + H].set(
                whh_t[:, band * H:(band + 1) * H])
            b_pad = b_pad.at[0, band * Hp:band * Hp + H].set(
                b_fused[band * H:(band + 1) * H])

        packed += [wih_pad.astype(jnp.bfloat16),
                   whh_pad.astype(jnp.bfloat16),
                   b_pad]
        h_pads.append(Hp)
        in_real, in_pad = H, Hp

    # Output head slab (also produces ht = h[:, H_last-1] via identity column O).
    w_out = params["out"]["w"]                            # (O, H_last)
    b_out = params["out"]["b"]                            # (O,)
    O = w_out.shape[0]
    H_last, Hp_last = in_real, in_pad
    assert O + 1 <= OUT_SLAB_LANES
    wout_slab = jnp.zeros((Hp_last, OUT_SLAB_LANES), jnp.float32)
    wout_slab = wout_slab.at[:H_last, :O].set(w_out.T)
    wout_slab = wout_slab.at[H_last - 1, O].set(1.0)
    bout_slab = jnp.zeros((1, OUT_SLAB_LANES), jnp.float32).at[0, :O].set(b_out)
    packed += [wout_slab.astype(jnp.bfloat16), bout_slab]
    return packed, h_pads, O


# ---------------------------------- wrapper -----------------------------------

@jax.jit
def encoder_forward(params, x):
    """x: (B, T, F) float32, batch-first. Returns (out (B, O), ht (B,))."""
    B, T, F = x.shape
    Bp = ((B + 7) // 8) * 8                      # pad batch to fill 8 sublanes

    packed, h_pads, O = _pack_params_for_kernel(params, F)
    L = len(h_pads)

    # Pad batch + flatten time-major (tiny, handled by XLA outside the kernel).
    xp = jnp.zeros((Bp, T, F), jnp.float32).at[:B].set(x)
    x_flat = jnp.transpose(xp, (1, 0, 2)).reshape(T * Bp, F)

    inputs = [x_flat] + packed
    in_specs = [_full_vmem_spec(a.shape) for a in inputs]

    max_g = 4 * max(h_pads)
    scratch = [pltpu.VMEM((T * Bp, max_g), jnp.float32)]                  # gates_x
    scratch += [pltpu.VMEM((T * Bp, h_pads[l]), jnp.float32)              # inter-layer seq
                for l in range(L - 1)]

    slab = pl.pallas_call(
        _make_encoder_kernel(L, Bp, T, tuple(h_pads)),
        out_shape=jax.ShapeDtypeStruct((Bp, OUT_SLAB_LANES), jnp.float32),
        in_specs=in_specs,
        out_specs=_full_vmem_spec((Bp, OUT_SLAB_LANES)),
        scratch_shapes=scratch,
    )(*inputs)
    return slab[:B, :O], slab[:B, O]


# ------------------------------ parameter init -------------------------------

def init_encoder_params(key, n_features, embedding_size, output_size,
                        n_layers_1=2, n_layers_2=1):
    """PyTorch-convention parameters: nn.LSTM (gate order i,f,g,o) + nn.Linear."""
    hidden_size = 2 * embedding_size

    def lstm_layer_params(k, in_size, hid):
        k1, k2, k3, k4 = jax.random.split(k, 4)
        bound = 1.0 / (hid ** 0.5)
        u = lambda kk, shape: jax.random.uniform(kk, shape, jnp.float32, -bound, bound)
        return dict(wih=u(k1, (4 * hid, in_size)), whh=u(k2, (4 * hid, hid)),
                    b_ih=u(k3, (4 * hid,)), b_hh=u(k4, (4 * hid,)))

    keys = jax.random.split(key, n_layers_1 + n_layers_2 + 1)
    params = {"lstm_enc": [], "lstm1": [], "out": {}}
    in_size = n_features
    for l in range(n_layers_1):
        params["lstm_enc"].append(lstm_layer_params(keys[l], in_size, hidden_size))
        in_size = hidden_size
    in_size = hidden_size
    for l in range(n_layers_2):
        params["lstm1"].append(
            lstm_layer_params(keys[n_layers_1 + l], in_size, embedding_size))
        in_size = embedding_size
    # Linear: kaiming_normal_ weight, zero bias (matches Encoder.weight_init)
    std = (2.0 / embedding_size) ** 0.5
    w_out = jax.random.normal(keys[-1], (output_size, embedding_size), jnp.float32) * std
    params["out"] = dict(w=w_out, b=jnp.zeros((output_size,), jnp.float32))
    return params


# ------------------------------ pure-JAX references ---------------------------

def _lstm_layer_ref(x, wih, whh, b_ih, b_hh, bf16_matmul):
    B = x.shape[0]
    H = whh.shape[1]
    wih_t, whh_t = wih.T, whh.T
    b = (b_ih + b_hh).reshape(1, -1)
    if bf16_matmul:
        wih_t = wih_t.astype(jnp.bfloat16)
        whh_t = whh_t.astype(jnp.bfloat16)

    def step(carry, x_t):
        h, c = carry
        if bf16_matmul:
            gates = (jnp.dot(x_t.astype(jnp.bfloat16), wih_t,
                             preferred_element_type=jnp.float32)
                     + jnp.dot(h.astype(jnp.bfloat16), whh_t,
                               preferred_element_type=jnp.float32) + b)
        else:
            gates = x_t @ wih_t + h @ whh_t + b
        i = jax.nn.sigmoid(gates[:, 0 * H:1 * H])
        f = jax.nn.sigmoid(gates[:, 1 * H:2 * H])
        g = jnp.tanh(gates[:, 2 * H:3 * H])
        o = jax.nn.sigmoid(gates[:, 3 * H:4 * H])
        c = f * c + i * g
        h = o * jnp.tanh(c)
        return (h, c), h

    h0 = jnp.zeros((B, H), jnp.float32)
    c0 = jnp.zeros((B, H), jnp.float32)
    (_, _), ys = jax.lax.scan(step, (h0, c0), jnp.swapaxes(x, 0, 1))
    return jnp.swapaxes(ys, 0, 1)


def encoder_forward_ref(params, x, bf16_matmul=False):
    h = x
    for lp in list(params["lstm_enc"]) + list(params["lstm1"]):
        h = _lstm_layer_ref(h, lp["wih"], lp["whh"], lp["b_ih"], lp["b_hh"], bf16_matmul)
    h_last = h[:, -1, :]
    ht = h_last[:, -1]
    w_out, b_out = params["out"]["w"], params["out"]["b"]
    if bf16_matmul:
        out = jnp.dot(h_last.astype(jnp.bfloat16), w_out.T.astype(jnp.bfloat16),
                      preferred_element_type=jnp.float32) + b_out
    else:
        out = h_last @ w_out.T + b_out
    return out, ht


# ------------------------------------ main ------------------------------------

if __name__ == "__main__":
    B = 2            # batch
    seq_in = 8       # sequence length
    n_features = 4
    embedding_size = 16   # -> hidden_size = 32
    output_size = 4
    n_layers_1 = 2
    n_layers_2 = 1

    key = jax.random.PRNGKey(0)
    k_params, k_x = jax.random.split(key)
    params = init_encoder_params(k_params, n_features, embedding_size,
                                 output_size, n_layers_1, n_layers_2)
    x = jax.random.normal(k_x, (B, seq_in, n_features), jnp.float32)

    out, ht = encoder_forward(params, x)
    jax.block_until_ready((out, ht))
    assert out.shape == (B, output_size) and ht.shape == (B,)

    # Tight check vs a bf16-matmul-matched pure-JAX reference (catches gate-reorder
    # / padding / packing bugs independent of bf16 rounding).
    out_m, ht_m = encoder_forward_ref(params, x, bf16_matmul=True)
    assert jnp.allclose(out, out_m, atol=5e-3, rtol=5e-3)
    assert jnp.allclose(ht, ht_m, atol=5e-3, rtol=5e-3)

    # Loose check vs the full-f32 reference (PyTorch-module semantics).
    out_f, ht_f = encoder_forward_ref(params, x, bf16_matmul=False)
    assert jnp.allclose(out, out_f, atol=5e-2, rtol=5e-2)
    assert jnp.allclose(ht, ht_f, atol=5e-2, rtol=5e-2)

    print("KERNEL_OK")
</pallas_src>

<mosaic_0001>
module attributes {stable_mosaic.version = 11 : i64} {
  func.func @kernel(%arg0: memref<64x4xf32, #tpu.memory_space<vmem>>, %arg1: memref<4x128xbf16, #tpu.memory_space<vmem>>, %arg2: memref<32x128xbf16, #tpu.memory_space<vmem>>, %arg3: memref<1x128xf32, #tpu.memory_space<vmem>>, %arg4: memref<32x128xbf16, #tpu.memory_space<vmem>>, %arg5: memref<32x128xbf16, #tpu.memory_space<vmem>>, %arg6: memref<1x128xf32, #tpu.memory_space<vmem>>, %arg7: memref<32x128xbf16, #tpu.memory_space<vmem>>, %arg8: memref<32x128xbf16, #tpu.memory_space<vmem>>, %arg9: memref<1x128xf32, #tpu.memory_space<vmem>>, %arg10: memref<32x128xbf16, #tpu.memory_space<vmem>>, %arg11: memref<1x128xf32, #tpu.memory_space<vmem>>, %arg12: memref<8x128xf32, #tpu.memory_space<vmem>>, %arg13: memref<64x128xf32, #tpu.memory_space<vmem>>, %arg14: memref<64x32xf32, #tpu.memory_space<vmem>>, %arg15: memref<64x32xf32, #tpu.memory_space<vmem>>) attributes {dimension_semantics = [], scalar_prefetch = 0 : i64, scratch_operands = 3 : i64, tpu.core_type = #tpu.core_type<tc>} {
    %c0 = arith.constant 0 : index
    %c0_0 = arith.constant 0 : index
    %0 = vector.load %arg0[%c0, %c0_0] : memref<64x4xf32, #tpu.memory_space<vmem>>, vector<64x4xf32>
    %1 = arith.truncf %0 : vector<64x4xf32> to vector<64x4xbf16>
    %c0_1 = arith.constant 0 : index
    %c0_2 = arith.constant 0 : index
    %2 = vector.load %arg1[%c0_1, %c0_2] : memref<4x128xbf16, #tpu.memory_space<vmem>>, vector<4x128xbf16>
    %c0_3 = arith.constant 0 : index
    %c0_4 = arith.constant 0 : index
    %3 = vector.load %arg2[%c0_3, %c0_4] : memref<32x128xbf16, #tpu.memory_space<vmem>>, vector<32x128xbf16>
    %c0_5 = arith.constant 0 : index
    %c0_6 = arith.constant 0 : index
    %4 = vector.load %arg3[%c0_5, %c0_6] : memref<1x128xf32, #tpu.memory_space<vmem>>, vector<1x128xf32>
    %cst = arith.constant dense<0.000000e+00> : vector<64x128xf32>
    %5 = tpu.matmul %1, %2, %cst {dimension_numbers = #tpu.dot_dimension_numbers<[1], [0], [0], [1], [0, 0, 1, 1], [], []>} : vector<64x4xbf16>, vector<4x128xbf16>, vector<64x128xf32> -> vector<64x128xf32>
    %6 = vector.broadcast %4 : vector<1x128xf32> to vector<64x128xf32>
    %7 = arith.addf %5, %6 : vector<64x128xf32>
    %c0_7 = arith.constant 0 : index
    %c0_8 = arith.constant 0 : index
    %8 = vector.load %arg13[%c0_7, %c0_8] : memref<64x128xf32, #tpu.memory_space<vmem>>, vector<64x128xf32>
    tpu.vector_store %arg13[%c0_7, %c0_8], %7 {strides = array<i32>} : memref<64x128xf32, #tpu.memory_space<vmem>>, vector<64x128xf32>,
    %cst_9 = arith.constant 0.000000e+00 : f32
    %9 = vector.broadcast %cst_9 : f32 to vector<8x32xf32>
    %cst_10 = arith.constant 0.000000e+00 : f32
    %10 = vector.broadcast %cst_10 : f32 to vector<8x32xf32>
    %c0_11 = arith.constant 0 : index
    %c0_12 = arith.constant 0 : index
    %11 = vector.load %arg13[%c0_11, %c0_12] : memref<64x128xf32, #tpu.memory_space<vmem>>, vector<8x128xf32>
    %12 = arith.truncf %9 : vector<8x32xf32> to vector<8x32xbf16>
    %cst_13 = arith.constant dense<0.000000e+00> : vector<8x128xf32>
    %13 = tpu.matmul %12, %3, %cst_13 {dimension_numbers = #tpu.dot_dimension_numbers<[1], [0], [0], [1], [0, 0, 1, 1], [], []>} : vector<8x32xbf16>, vector<32x128xbf16>, vector<8x128xf32> -> vector<8x128xf32>
    %14 = arith.addf %11, %13 : vector<8x128xf32>
    %15 = vector.extract_strided_slice %14 {offsets = [0, 0], sizes = [8, 96], strides = [1, 1]} : vector<8x128xf32> to vector<8x96xf32>
    %16 = arith.negf %15 : vector<8x96xf32>
    %17 = math.exp %16 : vector<8x96xf32>
    %cst_14 = arith.constant 1.000000e+00 : f32
    %18 = vector.broadcast %cst_14 : f32 to vector<8x96xf32>
    %19 = arith.addf %18, %17 : vector<8x96xf32>
    %20 = arith.divf %18, %19 : vector<8x96xf32>
    %21 = vector.extract_strided_slice %14 {offsets = [0, 96], sizes = [8, 32], strides = [1, 1]} : vector<8x128xf32> to vector<8x32xf32>
    %22 = math.tanh %21 : vector<8x32xf32>
    %23 = vector.extract_strided_slice %20 {offsets = [0, 0], sizes = [8, 32], strides = [1, 1]} : vector<8x96xf32> to vector<8x32xf32>
    %24 = vector.extract_strided_slice %20 {offsets = [0, 32], sizes = [8, 32], strides = [1, 1]} : vector<8x96xf32> to vector<8x32xf32>
    %25 = vector.extract_strided_slice %20 {offsets = [0, 64], sizes = [8, 32], strides = [1, 1]} : vector<8x96xf32> to vector<8x32xf32>
    %26 = arith.mulf %24, %10 : vector<8x32xf32>
    %27 = arith.mulf %23, %22 : vector<8x32xf32>
    %28 = arith.addf %26, %27 : vector<8x32xf32>
    %29 = math.tanh %28 : vector<8x32xf32>
    %30 = arith.mulf %25, %29 : vector<8x32xf32>
    %c0_15 = arith.constant 0 : index
    %c0_16 = arith.constant 0 : index
    %31 = vector.load %arg14[%c0_15, %c0_16] : memref<64x32xf32, #tpu.memory_space<vmem>>, vector<8x32xf32>
    tpu.vector_store %arg14[%c0_15, %c0_16], %30 {strides = array<i32>} : memref<64x32xf32, #tpu.memory_space<vmem>>, vector<8x32xf32>,
    %c8 = arith.constant 8 : index
    %c0_17 = arith.constant 0 : index
    %32 = vector.load %arg13[%c8, %c0_17] : memref<64x128xf32, #tpu.memory_space<vmem>>, vector<8x128xf32>
    %33 = arith.truncf %30 : vector<8x32xf32> to vector<8x32xbf16>
    %cst_18 = arith.constant dense<0.000000e+00> : vector<8x128xf32>
    %34 = tpu.matmul %33, %3, %cst_18 {dimension_numbers = #tpu.dot_dimension_numbers<[1], [0], [0], [1], [0, 0, 1, 1], [], []>} : vector<8x32xbf16>, vector<32x128xbf16>, vector<8x128xf32> -> vector<8x128xf32>
    %35 = arith.addf %32, %34 : vector<8x128xf32>
    %36 = vector.extract_strided_slice %35 {offsets = [0, 0], sizes = [8, 96], strides = [1, 1]} : vector<8x128xf32> to vector<8x96xf32>
    %37 = arith.negf %36 : vector<8x96xf32>
    %38 = math.exp %37 : vector<8x96xf32>
    %cst_19 = arith.constant 1.000000e+00 : f32
    %39 = vector.broadcast %cst_19 : f32 to vector<8x96xf32>
    %40 = arith.addf %39, %38 : vector<8x96xf32>
    %41 = arith.divf %39, %40 : vector<8x96xf32>
    %42 = vector.extract_strided_slice %35 {offsets = [0, 96], sizes = [8, 32], strides = [1, 1]} : vector<8x128xf32> to vector<8x32xf32>
    %43 = math.tanh %42 : vector<8x32xf32>
    %44 = vector.extract_strided_slice %41 {offsets = [0, 0], sizes = [8, 32], strides = [1, 1]} : vector<8x96xf32> to vector<8x32xf32>
    %45 = vector.extract_strided_slice %41 {offsets = [0, 32], sizes = [8, 32], strides = [1, 1]} : vector<8x96xf32> to vector<8x32xf32>
    %46 = vector.extract_strided_slice %41 {offsets = [0, 64], sizes = [8, 32], strides = [1, 1]} : vector<8x96xf32> to vector<8x32xf32>
    %47 = arith.mulf %45, %28 : vector<8x32xf32>
    %48 = arith.mulf %44, %43 : vector<8x32xf32>
    %49 = arith.addf %47, %48 : vector<8x32xf32>
    %50 = math.tanh %49 : vector<8x32xf32>
    %51 = arith.mulf %46, %50 : vector<8x32xf32>
    %c8_20 = arith.constant 8 : index
    %c0_21 = arith.constant 0 : index
    %52 = vector.load %arg14[%c8_20, %c0_21] : memref<64x32xf32, #tpu.memory_space<vmem>>, vector<8x32xf32>
    tpu.vector_store %arg14[%c8_20, %c0_21], %51 {strides = array<i32>} : memref<64x32xf32, #tpu.memory_space<vmem>>, vector<8x32xf32>,
    %c16 = arith.constant 16 : index
    %c0_22 = arith.constant 0 : index
    %53 = vector.load %arg13[%c16, %c0_22] : memref<64x128xf32, #tpu.memory_space<vmem>>, vector<8x128xf32>
    %54 = arith.truncf %51 : vector<8x32xf32> to vector<8x32xbf16>
    %cst_23 = arith.constant dense<0.000000e+00> : vector<8x128xf32>
    %55 = tpu.matmul %54, %3, %cst_23 {dimension_numbers = #tpu.dot_dimension_numbers<[1], [0], [0], [1], [0, 0, 1, 1], [], []>} : vector<8x32xbf16>, vector<32x128xbf16>, vector<8x128xf32> -> vector<8x128xf32>
    %56 = arith.addf %53, %55 : vector<8x128xf32>
    %57 = vector.extract_strided_slice %56 {offsets = [0, 0], sizes = [8, 96], strides = [1, 1]} : vector<8x128xf32> to vector<8x96xf32>
    %58 = arith.negf %57 : vector<8x96xf32>
    %59 = math.exp %58 : vector<8x96xf32>
    %cst_24 = arith.constant 1.000000e+00 : f32
    %60 = vector.broadcast %cst_24 : f32 to vector<8x96xf32>
    %61 = arith.addf %60, %59 : vector<8x96xf32>
    %62 = arith.divf %60, %61 : vector<8x96xf32>
    %63 = vector.extract_strided_slice %56 {offsets = [0, 96], sizes = [8, 32], strides = [1, 1]} : vector<8x128xf32> to vector<8x32xf32>
    %64 = math.tanh %63 : vector<8x32xf32>
    %65 = vector.extract_strided_slice %62 {offsets = [0, 0], sizes = [8, 32], strides = [1, 1]} : vector<8x96xf32> to vector<8x32xf32>
    %66 = vector.extract_strided_slice %62 {offsets = [0, 32], sizes = [8, 32], strides = [1, 1]} : vector<8x96xf32> to vector<8x32xf32>
    %67 = vector.extract_strided_slice %62 {offsets = [0, 64], sizes = [8, 32], strides = [1, 1]} : vector<8x96xf32> to vector<8x32xf32>
    %68 = arith.mulf %66, %49 : vector<8x32xf32>
    %69 = arith.mulf %65, %64 : vector<8x32xf32>
    %70 = arith.addf %68, %69 : vector<8x32xf32>
    %71 = math.tanh %70 : vector<8x32xf32>
    %72 = arith.mulf %67, %71 : vector<8x32xf32>
    %c16_25 = arith.constant 16 : index
    %c0_26 = arith.constant 0 : index
    %73 = vector.load %arg14[%c16_25, %c0_26] : memref<64x32xf32, #tpu.memory_space<vmem>>, vector<8x32xf32>
    tpu.vector_store %arg14[%c16_25, %c0_26], %72 {strides = array<i32>} : memref<64x32xf32, #tpu.memory_space<vmem>>, vector<8x32xf32>,
    %c24 = arith.constant 24 : index
    %c0_27 = arith.constant 0 : index
    %74 = vector.load %arg13[%c24, %c0_27] : memref<64x128xf32, #tpu.memory_space<vmem>>, vector<8x128xf32>
    %75 = arith.truncf %72 : vector<8x32xf32> to vector<8x32xbf16>
    %cst_28 = arith.constant dense<0.000000e+00> : vector<8x128xf32>
    %76 = tpu.matmul %75, %3, %cst_28 {dimension_numbers = #tpu.dot_dimension_numbers<[1], [0], [0], [1], [0, 0, 1, 1], [], []>} : vector<8x32xbf16>, vector<32x128xbf16>, vector<8x128xf32> -> vector<8x128xf32>
    %77 = arith.addf %74, %76 : vector<8x128xf32>
    %78 = vector.extract_strided_slice %77 {offsets = [0, 0], sizes = [8, 96], strides = [1, 1]} : vector<8x128xf32> to vector<8x96xf32>
    %79 = arith.negf %78 : vector<8x96xf32>
    %80 = math.exp %79 : vector<8x96xf32>
    %cst_29 = arith.constant 1.000000e+00 : f32
    %81 = vector.broadcast %cst_29 : f32 to vector<8x96xf32>
    %82 = arith.addf %81, %80 : vector<8x96xf32>
    %83 = arith.divf %81, %82 : vector<8x96xf32>
    %84 = vector.extract_strided_slice %77 {offsets = [0, 96], sizes = [8, 32], strides = [1, 1]} : vector<8x128xf32> to vector<8x32xf32>
    %85 = math.tanh %84 : vector<8x32xf32>
    %86 = vector.extract_strided_slice %83 {offsets = [0, 0], sizes = [8, 32], strides = [1, 1]} : vector<8x96xf32> to vector<8x32xf32>
    %87 = vector.extract_strided_slice %83 {offsets = [0, 32], sizes = [8, 32], strides = [1, 1]} : vector<8x96xf32> to vector<8x32xf32>
    %88 = vector.extract_strided_slice %83 {offsets = [0, 64], sizes = [8, 32], strides = [1, 1]} : vector<8x96xf32> to vector<8x32xf32>
    %89 = arith.mulf %87, %70 : vector<8x32xf32>
    %90 = arith.mulf %86, %85 : vector<8x32xf32>
    %91 = arith.addf %89, %90 : vector<8x32xf32>
    %92 = math.tanh %91 : vector<8x32xf32>
    %93 = arith.mulf %88, %92 : vector<8x32xf32>
    %c24_30 = arith.constant 24 : index
    %c0_31 = arith.constant 0 : index
    %94 = vector.load %arg14[%c24_30, %c0_31] : memref<64x32xf32, #tpu.memory_space<vmem>>, vector<8x32xf32>
    tpu.vector_store %arg14[%c24_30, %c0_31], %93 {strides = array<i32>} : memref<64x32xf32, #tpu.memory_space<vmem>>, vector<8x32xf32>,
    %c32 = arith.constant 32 : index
    %c0_32 = arith.constant 0 : index
    %95 = vector.load %arg13[%c32, %c0_32] : memref<64x128xf32, #tpu.memory_space<vmem>>, vector<8x128xf32>
    %96 = arith.truncf %93 : vector<8x32xf32> to vector<8x32xbf16>
    %cst_33 = arith.constant dense<0.000000e+00> : vector<8x128xf32>
    %97 = tpu.matmul %96, %3, %cst_33 {dimension_numbers = #tpu.dot_dimension_numbers<[1], [0], [0], [1], [0, 0, 1, 1], [], []>} : vector<8x32xbf16>, vector<32x128xbf16>, vector<8x128xf32> -> vector<8x128xf32>
    %98 = arith.addf %95, %97 : vector<8x128xf32>
    %99 = vector.extract_strided_slice %98 {offsets = [0, 0], sizes = [8, 96], strides = [1, 1]} : vector<8x128xf32> to vector<8x96xf32>
    %100 = arith.negf %99 : vector<8x96xf32>
    %101 = math.exp %100 : vector<8x96xf32>
    %cst_34 = arith.constant 1.000000e+00 : f32
    %102 = vector.broadcast %cst_34 : f32 to vector<8x96xf32>
    %103 = arith.addf %102, %101 : vector<8x96xf32>
    %104 = arith.divf %102, %103 : vector<8x96xf32>
    %105 = vector.extract_strided_slice %98 {offsets = [0, 96], sizes = [8, 32], strides = [1, 1]} : vector<8x128xf32> to vector<8x32xf32>
    %106 = math.tanh %105 : vector<8x32xf32>
    %107 = vector.extract_strided_slice %104 {offsets = [0, 0], sizes = [8, 32], strides = [1, 1]} : vector<8x96xf32> to vector<8x32xf32>
    %108 = vector.extract_strided_slice %104 {offsets = [0, 32], sizes = [8, 32], strides = [1, 1]} : vector<8x96xf32> to vector<8x32xf32>
    %109 = vector.extract_strided_slice %104 {offsets = [0, 64], sizes = [8, 32], strides = [1, 1]} : vector<8x96xf32> to vector<8x32xf32>
    %110 = arith.mulf %108, %91 : vector<8x32xf32>
    %111 = arith.mulf %107, %106 : vector<8x32xf32>
    %112 = arith.addf %110, %111 : vector<8x32xf32>
    %113 = math.tanh %112 : vector<8x32xf32>
    %114 = arith.mulf %109, %113 : vector<8x32xf32>
    %c32_35 = arith.constant 32 : index
    %c0_36 = arith.constant 0 : index
    %115 = vector.load %arg14[%c32_35, %c0_36] : memref<64x32xf32, #tpu.memory_space<vmem>>, vector<8x32xf32>
    tpu.vector_store %arg14[%c32_35, %c0_36], %114 {strides = array<i32>} : memref<64x32xf32, #tpu.memory_space<vmem>>, vector<8x32xf32>,
    %c40 = arith.constant 40 : index
    %c0_37 = arith.constant 0 : index
    %116 = vector.load %arg13[%c40, %c0_37] : memref<64x128xf32, #tpu.memory_space<vmem>>, vector<8x128xf32>
    %117 = arith.truncf %114 : vector<8x32xf32> to vector<8x32xbf16>
    %cst_38 = arith.constant dense<0.000000e+00> : vector<8x128xf32>
    %118 = tpu.matmul %117, %3, %cst_38 {dimension_numbers = #tpu.dot_dimension_numbers<[1], [0], [0], [1], [0, 0, 1, 1], [], []>} : vector<8x32xbf16>, vector<32x128xbf16>, vector<8x128xf32> -> vector<8x128xf32>
    %119 = arith.addf %116, %118 : vector<8x128xf32>
    %120 = vector.extract_strided_slice %119 {offsets = [0, 0], sizes = [8, 96], strides = [1, 1]} : vector<8x128xf32> to vector<8x96xf32>
    %121 = arith.negf %120 : vector<8x96xf32>
    %122 = math.exp %121 : vector<8x96xf32>
    %cst_39 = arith.constant 1.000000e+00 : f32
    %123 = vector.broadcast %cst_39 : f32 to vector<8x96xf32>
    %124 = arith.addf %123, %122 : vector<8x96xf32>
    %125 = arith.divf %123, %124 : vector<8x96xf32>
    %126 = vector.extract_strided_slice %119 {offsets = [0, 96], sizes = [8, 32], strides = [1, 1]} : vector<8x128xf32> to vector<8x32xf32>
    %127 = math.tanh %126 : vector<8x32xf32>
    %128 = vector.extract_strided_slice %125 {offsets = [0, 0], sizes = [8, 32], strides = [1, 1]} : vector<8x96xf32> to vector<8x32xf32>
    %129 = vector.extract_strided_slice %125 {offsets = [0, 32], sizes = [8, 32], strides = [1, 1]} : vector<8x96xf32> to vector<8x32xf32>
    %130 = vector.extract_strided_slice %125 {offsets = [0, 64], sizes = [8, 32], strides = [1, 1]} : vector<8x96xf32> to vector<8x32xf32>
    %131 = arith.mulf %129, %112 : vector<8x32xf32>
    %132 = arith.mulf %128, %127 : vector<8x32xf32>
    %133 = arith.addf %131, %132 : vector<8x32xf32>
    %134 = math.tanh %133 : vector<8x32xf32>
    %135 = arith.mulf %130, %134 : vector<8x32xf32>
    %c40_40 = arith.constant 40 : index
    %c0_41 = arith.constant 0 : index
    %136 = vector.load %arg14[%c40_40, %c0_41] : memref<64x32xf32, #tpu.memory_space<vmem>>, vector<8x32xf32>
    tpu.vector_store %arg14[%c40_40, %c0_41], %135 {strides = array<i32>} : memref<64x32xf32, #tpu.memory_space<vmem>>, vector<8x32xf32>,
    %c48 = arith.constant 48 : index
    %c0_42 = arith.constant 0 : index
    %137 = vector.load %arg13[%c48, %c0_42] : memref<64x128xf32, #tpu.memory_space<vmem>>, vector<8x128xf32>
    %138 = arith.truncf %135 : vector<8x32xf32> to vector<8x32xbf16>
    %cst_43 = arith.constant dense<0.000000e+00> : vector<8x128xf32>
    %139 = tpu.matmul %138, %3, %cst_43 {dimension_numbers = #tpu.dot_dimension_numbers<[1], [0], [0], [1], [0, 0, 1, 1], [], []>} : vector<8x32xbf16>, vector<32x128xbf16>, vector<8x128xf32> -> vector<8x128xf32>
    %140 = arith.addf %137, %139 : vector<8x128xf32>
    %141 = vector.extract_strided_slice %140 {offsets = [0, 0], sizes = [8, 96], strides = [1, 1]} : vector<8x128xf32> to vector<8x96xf32>
    %142 = arith.negf %141 : vector<8x96xf32>
    %143 = math.exp %142 : vector<8x96xf32>
    %cst_44 = arith.constant 1.000000e+00 : f32
    %144 = vector.broadcast %cst_44 : f32 to vector<8x96xf32>
    %145 = arith.addf %144, %143 : vector<8x96xf32>
    %146 = arith.divf %144, %145 : vector<8x96xf32>
    %147 = vector.extract_strided_slice %140 {offsets = [0, 96], sizes = [8, 32], strides = [1, 1]} : vector<8x128xf32> to vector<8x32xf32>
    %148 = math.tanh %147 : vector<8x32xf32>
    %149 = vector.extract_strided_slice %146 {offsets = [0, 0], sizes = [8, 32], strides = [1, 1]} : vector<8x96xf32> to vector<8x32xf32>
    %150 = vector.extract_strided_slice %146 {offsets = [0, 32], sizes = [8, 32], strides = [1, 1]} : vector<8x96xf32> to vector<8x32xf32>
    %151 = vector.extract_strided_slice %146 {offsets = [0, 64], sizes = [8, 32], strides = [1, 1]} : vector<8x96xf32> to vector<8x32xf32>
    %152 = arith.mulf %150, %133 : vector<8x32xf32>
    %153 = arith.mulf %149, %148 : vector<8x32xf32>
    %154 = arith.addf %152, %153 : vector<8x32xf32>
    %155 = math.tanh %154 : vector<8x32xf32>
    %156 = arith.mulf %151, %155 : vector<8x32xf32>
    %c48_45 = arith.constant 48 : index
    %c0_46 = arith.constant 0 : index
    %157 = vector.load %arg14[%c48_45, %c0_46] : memref<64x32xf32, #tpu.memory_space<vmem>>, vector<8x32xf32>
    tpu.vector_store %arg14[%c48_45, %c0_46], %156 {strides = array<i32>} : memref<64x32xf32, #tpu.memory_space<vmem>>, vector<8x32xf32>,
    %c56 = arith.constant 56 : index
    %c0_47 = arith.constant 0 : index
    %158 = vector.load %arg13[%c56, %c0_47] : memref<64x128xf32, #tpu.memory_space<vmem>>, vector<8x128xf32>
    %159 = arith.truncf %156 : vector<8x32xf32> to vector<8x32xbf16>
    %cst_48 = arith.constant dense<0.000000e+00> : vector<8x128xf32>
    %160 = tpu.matmul %159, %3, %cst_48 {dimension_numbers = #tpu.dot_dimension_numbers<[1], [0], [0], [1], [0, 0, 1, 1], [], []>} : vector<8x32xbf16>, vector<32x128xbf16>, vector<8x128xf32> -> vector<8x128xf32>
    %161 = arith.addf %158, %160 : vector<8x128xf32>
    %162 = vector.extract_strided_slice %161 {offsets = [0, 0], sizes = [8, 96], strides = [1, 1]} : vector<8x128xf32> to vector<8x96xf32>
    %163 = arith.negf %162 : vector<8x96xf32>
    %164 = math.exp %163 : vector<8x96xf32>
    %cst_49 = arith.constant 1.000000e+00 : f32
    %165 = vector.broadcast %cst_49 : f32 to vector<8x96xf32>
    %166 = arith.addf %165, %164 : vector<8x96xf32>
    %167 = arith.divf %165, %166 : vector<8x96xf32>
    %168 = vector.extract_strided_slice %161 {offsets = [0, 96], sizes = [8, 32], strides = [1, 1]} : vector<8x128xf32> to vector<8x32xf32>
    %169 = math.tanh %168 : vector<8x32xf32>
    %170 = vector.extract_strided_slice %167 {offsets = [0, 0], sizes = [8, 32], strides = [1, 1]} : vector<8x96xf32> to vector<8x32xf32>
    %171 = vector.extract_strided_slice %167 {offsets = [0, 32], sizes = [8, 32], strides = [1, 1]} : vector<8x96xf32> to vector<8x32xf32>
    %172 = vector.extract_strided_slice %167 {offsets = [0, 64], sizes = [8, 32], strides = [1, 1]} : vector<8x96xf32> to vector<8x32xf32>
    %173 = arith.mulf %171, %154 : vector<8x32xf32>
    %174 = arith.mulf %170, %169 : vector<8x32xf32>
    %175 = arith.addf %173, %174 : vector<8x32xf32>
    %176 = math.tanh %175 : vector<8x32xf32>
    %177 = arith.mulf %172, %176 : vector<8x32xf32>
    %c56_50 = arith.constant 56 : index
    %c0_51 = arith.constant 0 : index
    %178 = vector.load %arg14[%c56_50, %c0_51] : memref<64x32xf32, #tpu.memory_space<vmem>>, vector<8x32xf32>
    tpu.vector_store %arg14[%c56_50, %c0_51], %177 {strides = array<i32>} : memref<64x32xf32, #tpu.memory_space<vmem>>, vector<8x32xf32>,
    %c0_52 = arith.constant 0 : index
    %c0_53 = arith.constant 0 : index
    %179 = vector.load %arg14[%c0_52, %c0_53] : memref<64x32xf32, #tpu.memory_space<vmem>>, vector<64x32xf32>
    %180 = arith.truncf %179 : vector<64x32xf32> to vector<64x32xbf16>
    %c0_54 = arith.constant 0 : index
    %c0_55 = arith.constant 0 : index
    %181 = vector.load %arg4[%c0_54, %c0_55] : memref<32x128xbf16, #tpu.memory_space<vmem>>, vector<32x128xbf16>
    %c0_56 = arith.constant 0 : index
    %c0_57 = arith.constant 0 : index
    %182 = vector.load %arg5[%c0_56, %c0_57] : memref<32x128xbf16, #tpu.memory_space<vmem>>, vector<32x128xbf16>
    %c0_58 = arith.constant 0 : index
    %c0_59 = arith.constant 0 : index
    %183 = vector.load %arg6[%c0_58, %c0_59] : memref<1x128xf32, #tpu.memory_space<vmem>>, vector<1x128xf32>
    %cst_60 = arith.constant dense<0.000000e+00> : vector<64x128xf32>
    %184 = tpu.matmul %180, %181, %cst_60 {dimension_numbers = #tpu.dot_dimension_numbers<[1], [0], [0], [1], [0, 0, 1, 1], [], []>} : vector<64x32xbf16>, vector<32x128xbf16>, vector<64x128xf32> -> vector<64x128xf32>
    %185 = vector.broadcast %183 : vector<1x128xf32> to vector<64x128xf32>
    %186 = arith.addf %184, %185 : vector<64x128xf32>
    %c0_61 = arith.constant 0 : index
    %c0_62 = arith.constant 0 : index
    %187 = vector.load %arg13[%c0_61, %c0_62] : memref<64x128xf32, #tpu.memory_space<vmem>>, vector<64x128xf32>
    tpu.vector_store %arg13[%c0_61, %c0_62], %186 {strides = array<i32>} : memref<64x128xf32, #tpu.memory_space<vmem>>, vector<64x128xf32>,
    %cst_63 = arith.constant 0.000000e+00 : f32
    %188 = vector.broadcast %cst_63 : f32 to vector<8x32xf32>
    %cst_64 = arith.constant 0.000000e+00 : f32
    %189 = vector.broadcast %cst_64 : f32 to vector<8x32xf32>
    %c0_65 = arith.constant 0 : index
    %c0_66 = arith.constant 0 : index
    %190 = vector.load %arg13[%c0_65, %c0_66] : memref<64x128xf32, #tpu.memory_space<vmem>>, vector<8x128xf32>
    %191 = arith.truncf %188 : vector<8x32xf32> to vector<8x32xbf16>
    %cst_67 = arith.constant dense<0.000000e+00> : vector<8x128xf32>
    %192 = tpu.matmul %191, %182, %cst_67 {dimension_numbers = #tpu.dot_dimension_numbers<[1], [0], [0], [1], [0, 0, 1, 1], [], []>} : vector<8x32xbf16>, vector<32x128xbf16>, vector<8x128xf32> -> vector<8x128xf32>
    %193 = arith.addf %190, %192 : vector<8x128xf32>
    %194 = vector.extract_strided_slice %193 {offsets = [0, 0], sizes = [8, 96], strides = [1, 1]} : vector<8x128xf32> to vector<8x96xf32>
    %195 = arith.negf %194 : vector<8x96xf32>
    %196 = math.exp %195 : vector<8x96xf32>
    %cst_68 = arith.constant 1.000000e+00 : f32
    %197 = vector.broadcast %cst_68 : f32 to vector<8x96xf32>
    %198 = arith.addf %197, %196 : vector<8x96xf32>
    %199 = arith.divf %197, %198 : vector<8x96xf32>
    %200 = vector.extract_strided_slice %193 {offsets = [0, 96], sizes = [8, 32], strides = [1, 1]} : vector<8x128xf32> to vector<8x32xf32>
    %201 = math.tanh %200 : vector<8x32xf32>
    %202 = vector.extract_strided_slice %199 {offsets = [0, 0], sizes = [8, 32], strides = [1, 1]} : vector<8x96xf32> to vector<8x32xf32>
    %203 = vector.extract_strided_slice %199 {offsets = [0, 32], sizes = [8, 32], strides = [1, 1]} : vector<8x96xf32> to vector<8x32xf32>
    %204 = vector.extract_strided_slice %199 {offsets = [0, 64], sizes = [8, 32], strides = [1, 1]} : vector<8x96xf32> to vector<8x32xf32>
    %205 = arith.mulf %203, %189 : vector<8x32xf32>
    %206 = arith.mulf %202, %201 : vector<8x32xf32>
    %207 = arith.addf %205, %206 : vector<8x32xf32>
    %208 = math.tanh %207 : vector<8x32xf32>
    %209 = arith.mulf %204, %208 : vector<8x32xf32>
    %c0_69 = arith.constant 0 : index
    %c0_70 = arith.constant 0 : index
    %210 = vector.load %arg15[%c0_69, %c0_70] : memref<64x32xf32, #tpu.memory_space<vmem>>, vector<8x32xf32>
    tpu.vector_store %arg15[%c0_69, %c0_70], %209 {strides = array<i32>} : memref<64x32xf32, #tpu.memory_space<vmem>>, vector<8x32xf32>,
    %c8_71 = arith.constant 8 : index
    %c0_72 = arith.constant 0 : index
    %211 = vector.load %arg13[%c8_71, %c0_72] : memref<64x128xf32, #tpu.memory_space<vmem>>, vector<8x128xf32>
    %212 = arith.truncf %209 : vector<8x32xf32> to vector<8x32xbf16>
    %cst_73 = arith.constant dense<0.000000e+00> : vector<8x128xf32>
    %213 = tpu.matmul %212, %182, %cst_73 {dimension_numbers = #tpu.dot_dimension_numbers<[1], [0], [0], [1], [0, 0, 1, 1], [], []>} : vector<8x32xbf16>, vector<32x128xbf16>, vector<8x128xf32> -> vector<8x128xf32>
    %214 = arith.addf %211, %213 : vector<8x128xf32>
    %215 = vector.extract_strided_slice %214 {offsets = [0, 0], sizes = [8, 96], strides = [1, 1]} : vector<8x128xf32> to vector<8x96xf32>
    %216 = arith.negf %215 : vector<8x96xf32>
    %217 = math.exp %216 : vector<8x96xf32>
    %cst_74 = arith.constant 1.000000e+00 : f32
    %218 = vector.broadcast %cst_74 : f32 to vector<8x96xf32>
    %219 = arith.addf %218, %217 : vector<8x96xf32>
    %220 = arith.divf %218, %219 : vector<8x96xf32>
    %221 = vector.extract_strided_slice %214 {offsets = [0, 96], sizes = [8, 32], strides = [1, 1]} : vector<8x128xf32> to vector<8x32xf32>
    %222 = math.tanh %221 : vector<8x32xf32>
    %223 = vector.extract_strided_slice %220 {offsets = [0, 0], sizes = [8, 32], strides = [1, 1]} : vector<8x96xf32> to vector<8x32xf32>
    %224 = vector.extract_strided_slice %220 {offsets = [0, 32], sizes = [8, 32], strides = [1, 1]} : vector<8x96xf32> to vector<8x32xf32>
    %225 = vector.extract_strided_slice %220 {offsets = [0, 64], sizes = [8, 32], strides = [1, 1]} : vector<8x96xf32> to vector<8x32xf32>
    %226 = arith.mulf %224, %207 : vector<8x32xf32>
    %227 = arith.mulf %223, %222 : vector<8x32xf32>
    %228 = arith.addf %226, %227 : vector<8x32xf32>
    %229 = math.tanh %228 : vector<8x32xf32>
    %230 = arith.mulf %225, %229 : vector<8x32xf32>
    %c8_75 = arith.constant 8 : index
    %c0_76 = arith.constant 0 : index
    %231 = vector.load %arg15[%c8_75, %c0_76] : memref<64x32xf32, #tpu.memory_space<vmem>>, vector<8x32xf32>
    tpu.vector_store %arg15[%c8_75, %c0_76], %230 {strides = array<i32>} : memref<64x32xf32, #tpu.memory_space<vmem>>, vector<8x32xf32>,
    %c16_77 = arith.constant 16 : index
    %c0_78 = arith.constant 0 : index
    %232 = vector.load %arg13[%c16_77, %c0_78] : memref<64x128xf32, #tpu.memory_space<vmem>>, vector<8x128xf32>
    %233 = arith.truncf %230 : vector<8x32xf32> to vector<8x32xbf16>
    %cst_79 = arith.constant dense<0.000000e+00> : vector<8x128xf32>
    %234 = tpu.matmul %233, %182, %cst_79 {dimension_numbers = #tpu.dot_dimension_numbers<[1], [0], [0], [1], [0, 0, 1, 1], [], []>} : vector<8x32xbf16>, vector<32x128xbf16>, vector<8x128xf32> -> vector<8x128xf32>
    %235 = arith.addf %232, %234 : vector<8x128xf32>
    %236 = vector.extract_strided_slice %235 {offsets = [0, 0], sizes = [8, 96], strides = [1, 1]} : vector<8x128xf32> to vector<8x96xf32>
    %237 = arith.negf %236 : vector<8x96xf32>
    %238 = math.exp %237 : vector<8x96xf32>
    %cst_80 = arith.constant 1.000000e+00 : f32
    %239 = vector.broadcast %cst_80 : f32 to vector<8x96xf32>
    %240 = arith.addf %239, %238 : vector<8x96xf32>
    %241 = arith.divf %239, %240 : vector<8x96xf32>
    %242 = vector.extract_strided_slice %235 {offsets = [0, 96], sizes = [8, 32], strides = [1, 1]} : vector<8x128xf32> to vector<8x32xf32>
    %243 = math.tanh %242 : vector<8x32xf32>
    %244 = vector.extract_strided_slice %241 {offsets = [0, 0], sizes = [8, 32], strides = [1, 1]} : vector<8x96xf32> to vector<8x32xf32>
    %245 = vector.extract_strided_slice %241 {offsets = [0, 32], sizes = [8, 32], strides = [1, 1]} : vector<8x96xf32> to vector<8x32xf32>
    %246 = vector.extract_strided_slice %241 {offsets = [0, 64], sizes = [8, 32], strides = [1, 1]} : vector<8x96xf32> to vector<8x32xf32>
    %247 = arith.mulf %245, %228 : vector<8x32xf32>
    %248 = arith.mulf %244, %243 : vector<8x32xf32>
    %249 = arith.addf %247, %248 : vector<8x32xf32>
    %250 = math.tanh %249 : vector<8x32xf32>
    %251 = arith.mulf %246, %250 : vector<8x32xf32>
    %c16_81 = arith.constant 16 : index
    %c0_82 = arith.constant 0 : index
    %252 = vector.load %arg15[%c16_81, %c0_82] : memref<64x32xf32, #tpu.memory_space<vmem>>, vector<8x32xf32>
    tpu.vector_store %arg15[%c16_81, %c0_82], %251 {strides = array<i32>} : memref<64x32xf32, #tpu.memory_space<vmem>>, vector<8x32xf32>,
    %c24_83 = arith.constant 24 : index
    %c0_84 = arith.constant 0 : index
    %253 = vector.load %arg13[%c24_83, %c0_84] : memref<64x128xf32, #tpu.memory_space<vmem>>, vector<8x128xf32>
    %254 = arith.truncf %251 : vector<8x32xf32> to vector<8x32xbf16>
    %cst_85 = arith.constant dense<0.000000e+00> : vector<8x128xf32>
    %255 = tpu.matmul %254, %182, %cst_85 {dimension_numbers = #tpu.dot_dimension_numbers<[1], [0], [0], [1], [0, 0, 1, 1], [], []>} : vector<8x32xbf16>, vector<32x128xbf16>, vector<8x128xf32> -> vector<8x128xf32>
    %256 = arith.addf %253, %255 : vector<8x128xf32>
    %257 = vector.extract_strided_slice %256 {offsets = [0, 0], sizes = [8, 96], strides = [1, 1]} : vector<8x128xf32> to vector<8x96xf32>
    %258 = arith.negf %257 : vector<8x96xf32>
    %259 = math.exp %258 : vector<8x96xf32>
    %cst_86 = arith.constant 1.000000e+00 : f32
    %260 = vector.broadcast %cst_86 : f32 to vector<8x96xf32>
    %261 = arith.addf %260, %259 : vector<8x96xf32>
    %262 = arith.divf %260, %261 : vector<8x96xf32>
    %263 = vector.extract_strided_slice %256 {offsets = [0, 96], sizes = [8, 32], strides = [1, 1]} : vector<8x128xf32> to vector<8x32xf32>
    %264 = math.tanh %263 : vector<8x32xf32>
    %265 = vector.extract_strided_slice %262 {offsets = [0, 0], sizes = [8, 32], strides = [1, 1]} : vector<8x96xf32> to vector<8x32xf32>
    %266 = vector.extract_strided_slice %262 {offsets = [0, 32], sizes = [8, 32], strides = [1, 1]} : vector<8x96xf32> to vector<8x32xf32>
    %267 = vector.extract_strided_slice %262 {offsets = [0, 64], sizes = [8, 32], strides = [1, 1]} : vector<8x96xf32> to vector<8x32xf32>
    %268 = arith.mulf %266, %249 : vector<8x32xf32>
    %269 = arith.mulf %265, %264 : vector<8x32xf32>
    %270 = arith.addf %268, %269 : vector<8x32xf32>
    %271 = math.tanh %270 : vector<8x32xf32>
    %272 = arith.mulf %267, %271 : vector<8x32xf32>
    %c24_87 = arith.constant 24 : index
    %c0_88 = arith.constant 0 : index
    %273 = vector.load %arg15[%c24_87, %c0_88] : memref<64x32xf32, #tpu.memory_space<vmem>>, vector<8x32xf32>
    tpu.vector_store %arg15[%c24_87, %c0_88], %272 {strides = array<i32>} : memref<64x32xf32, #tpu.memory_space<vmem>>, vector<8x32xf32>,
    %c32_89 = arith.constant 32 : index
    %c0_90 = arith.constant 0 : index
    %274 = vector.load %arg13[%c32_89, %c0_90] : memref<64x128xf32, #tpu.memory_space<vmem>>, vector<8x128xf32>
    %275 = arith.truncf %272 : vector<8x32xf32> to vector<8x32xbf16>
    %cst_91 = arith.constant dense<0.000000e+00> : vector<8x128xf32>
    %276 = tpu.matmul %275, %182, %cst_91 {dimension_numbers = #tpu.dot_dimension_numbers<[1], [0], [0], [1], [0, 0, 1, 1], [], []>} : vector<8x32xbf16>, vector<32x128xbf16>, vector<8x128xf32> -> vector<8x128xf32>
    %277 = arith.addf %274, %276 : vector<8x128xf32>
    %278 = vector.extract_strided_slice %277 {offsets = [0, 0], sizes = [8, 96], strides = [1, 1]} : vector<8x128xf32> to vector<8x96xf32>
    %279 = arith.negf %278 : vector<8x96xf32>
    %280 = math.exp %279 : vector<8x96xf32>
    %cst_92 = arith.constant 1.000000e+00 : f32
    %281 = vector.broadcast %cst_92 : f32 to vector<8x96xf32>
    %282 = arith.addf %281, %280 : vector<8x96xf32>
    %283 = arith.divf %281, %282 : vector<8x96xf32>
    %284 = vector.extract_strided_slice %277 {offsets = [0, 96], sizes = [8, 32], strides = [1, 1]} : vector<8x128xf32> to vector<8x32xf32>
    %285 = math.tanh %284 : vector<8x32xf32>
    %286 = vector.extract_strided_slice %283 {offsets = [0, 0], sizes = [8, 32], strides = [1, 1]} : vector<8x96xf32> to vector<8x32xf32>
    %287 = vector.extract_strided_slice %283 {offsets = [0, 32], sizes = [8, 32], strides = [1, 1]} : vector<8x96xf32> to vector<8x32xf32>
    %288 = vector.extract_strided_slice %283 {offsets = [0, 64], sizes = [8, 32], strides = [1, 1]} : vector<8x96xf32> to vector<8x32xf32>
    %289 = arith.mulf %287, %270 : vector<8x32xf32>
    %290 = arith.mulf %286, %285 : vector<8x32xf32>
    %291 = arith.addf %289, %290 : vector<8x32xf32>
    %292 = math.tanh %291 : vector<8x32xf32>
    %293 = arith.mulf %288, %292 : vector<8x32xf32>
    %c32_93 = arith.constant 32 : index
    %c0_94 = arith.constant 0 : index
    %294 = vector.load %arg15[%c32_93, %c0_94] : memref<64x32xf32, #tpu.memory_space<vmem>>, vector<8x32xf32>
    tpu.vector_store %arg15[%c32_93, %c0_94], %293 {strides = array<i32>} : memref<64x32xf32, #tpu.memory_space<vmem>>, vector<8x32xf32>,
    %c40_95 = arith.constant 40 : index
    %c0_96 = arith.constant 0 : index
    %295 = vector.load %arg13[%c40_95, %c0_96] : memref<64x128xf32, #tpu.memory_space<vmem>>, vector<8x128xf32>
    %296 = arith.truncf %293 : vector<8x32xf32> to vector<8x32xbf16>
    %cst_97 = arith.constant dense<0.000000e+00> : vector<8x128xf32>
    %297 = tpu.matmul %296, %182, %cst_97 {dimension_numbers = #tpu.dot_dimension_numbers<[1], [0], [0], [1], [0, 0, 1, 1], [], []>} : vector<8x32xbf16>, vector<32x128xbf16>, vector<8x128xf32> -> vector<8x128xf32>
    %298 = arith.addf %295, %297 : vector<8x128xf32>
    %299 = vector.extract_strided_slice %298 {offsets = [0, 0], sizes = [8, 96], strides = [1, 1]} : vector<8x128xf32> to vector<8x96xf32>
    %300 = arith.negf %299 : vector<8x96xf32>
    %301 = math.exp %300 : vector<8x96xf32>
    %cst_98 = arith.constant 1.000000e+00 : f32
    %302 = vector.broadcast %cst_98 : f32 to vector<8x96xf32>
    %303 = arith.addf %302, %301 : vector<8x96xf32>
    %304 = arith.divf %302, %303 : vector<8x96xf32>
    %305 = vector.extract_strided_slice %298 {offsets = [0, 96], sizes = [8, 32], strides = [1, 1]} : vector<8x128xf32> to vector<8x32xf32>
    %306 = math.tanh %305 : vector<8x32xf32>
    %307 = vector.extract_strided_slice %304 {offsets = [0, 0], sizes = [8, 32], strides = [1, 1]} : vector<8x96xf32> to vector<8x32xf32>
    %308 = vector.extract_strided_slice %304 {offsets = [0, 32], sizes = [8, 32], strides = [1, 1]} : vector<8x96xf32> to vector<8x32xf32>
    %309 = vector.extract_strided_slice %304 {offsets = [0, 64], sizes = [8, 32], strides = [1, 1]} : vector<8x96xf32> to vector<8x32xf32>
    %310 = arith.mulf %308, %291 : vector<8x32xf32>
    %311 = arith.mulf %307, %306 : vector<8x32xf32>
    %312 = arith.addf %310, %311 : vector<8x32xf32>
    %313 = math.tanh %312 : vector<8x32xf32>
    %314 = arith.mulf %309, %313 : vector<8x32xf32>
    %c40_99 = arith.constant 40 : index
    %c0_100 = arith.constant 0 : index
    %315 = vector.load %arg15[%c40_99, %c0_100] : memref<64x32xf32, #tpu.memory_space<vmem>>, vector<8x32xf32>
    tpu.vector_store %arg15[%c40_99, %c0_100], %314 {strides = array<i32>} : memref<64x32xf32, #tpu.memory_space<vmem>>, vector<8x32xf32>,
    %c48_101 = arith.constant 48 : index
    %c0_102 = arith.constant 0 : index
    %316 = vector.load %arg13[%c48_101, %c0_102] : memref<64x128xf32, #tpu.memory_space<vmem>>, vector<8x128xf32>
    %317 = arith.truncf %314 : vector<8x32xf32> to vector<8x32xbf16>
    %cst_103 = arith.constant dense<0.000000e+00> : vector<8x128xf32>
    %318 = tpu.matmul %317, %182, %cst_103 {dimension_numbers = #tpu.dot_dimension_numbers<[1], [0], [0], [1], [0, 0, 1, 1], [], []>} : vector<8x32xbf16>, vector<32x128xbf16>, vector<8x128xf32> -> vector<8x128xf32>
    %319 = arith.addf %316, %318 : vector<8x128xf32>
    %320 = vector.extract_strided_slice %319 {offsets = [0, 0], sizes = [8, 96], strides = [1, 1]} : vector<8x128xf32> to vector<8x96xf32>
    %321 = arith.negf %320 : vector<8x96xf32>
    %322 = math.exp %321 : vector<8x96xf32>
    %cst_104 = arith.constant 1.000000e+00 : f32
    %323 = vector.broadcast %cst_104 : f32 to vector<8x96xf32>
    %324 = arith.addf %323, %322 : vector<8x96xf32>
    %325 = arith.divf %323, %324 : vector<8x96xf32>
    %326 = vector.extract_strided_slice %319 {offsets = [0, 96], sizes = [8, 32], strides = [1, 1]} : vector<8x128xf32> to vector<8x32xf32>
    %327 = math.tanh %326 : vector<8x32xf32>
    %328 = vector.extract_strided_slice %325 {offsets = [0, 0], sizes = [8, 32], strides = [1, 1]} : vector<8x96xf32> to vector<8x32xf32>
    %329 = vector.extract_strided_slice %325 {offsets = [0, 32], sizes = [8, 32], strides = [1, 1]} : vector<8x96xf32> to vector<8x32xf32>
    %330 = vector.extract_strided_slice %325 {offsets = [0, 64], sizes = [8, 32], strides = [1, 1]} : vector<8x96xf32> to vector<8x32xf32>
    %331 = arith.mulf %329, %312 : vector<8x32xf32>
    %332 = arith.mulf %328, %327 : vector<8x32xf32>
    %333 = arith.addf %331, %332 : vector<8x32xf32>
    %334 = math.tanh %333 : vector<8x32xf32>
    %335 = arith.mulf %330, %334 : vector<8x32xf32>
    %c48_105 = arith.constant 48 : index
    %c0_106 = arith.constant 0 : index
    %336 = vector.load %arg15[%c48_105, %c0_106] : memref<64x32xf32, #tpu.memory_space<vmem>>, vector<8x32xf32>
    tpu.vector_store %arg15[%c48_105, %c0_106], %335 {strides = array<i32>} : memref<64x32xf32, #tpu.memory_space<vmem>>, vector<8x32xf32>,
    %c56_107 = arith.constant 56 : index
    %c0_108 = arith.constant 0 : index
    %337 = vector.load %arg13[%c56_107, %c0_108] : memref<64x128xf32, #tpu.memory_space<vmem>>, vector<8x128xf32>
    %338 = arith.truncf %335 : vector<8x32xf32> to vector<8x32xbf16>
    %cst_109 = arith.constant dense<0.000000e+00> : vector<8x128xf32>
    %339 = tpu.matmul %338, %182, %cst_109 {dimension_numbers = #tpu.dot_dimension_numbers<[1], [0], [0], [1], [0, 0, 1, 1], [], []>} : vector<8x32xbf16>, vector<32x128xbf16>, vector<8x128xf32> -> vector<8x128xf32>
    %340 = arith.addf %337, %339 : vector<8x128xf32>
    %341 = vector.extract_strided_slice %340 {offsets = [0, 0], sizes = [8, 96], strides = [1, 1]} : vector<8x128xf32> to vector<8x96xf32>
    %342 = arith.negf %341 : vector<8x96xf32>
    %343 = math.exp %342 : vector<8x96xf32>
    %cst_110 = arith.constant 1.000000e+00 : f32
    %344 = vector.broadcast %cst_110 : f32 to vector<8x96xf32>
    %345 = arith.addf %344, %343 : vector<8x96xf32>
    %346 = arith.divf %344, %345 : vector<8x96xf32>
    %347 = vector.extract_strided_slice %340 {offsets = [0, 96], sizes = [8, 32], strides = [1, 1]} : vector<8x128xf32> to vector<8x32xf32>
    %348 = math.tanh %347 : vector<8x32xf32>
    %349 = vector.extract_strided_slice %346 {offsets = [0, 0], sizes = [8, 32], strides = [1, 1]} : vector<8x96xf32> to vector<8x32xf32>
    %350 = vector.extract_strided_slice %346 {offsets = [0, 32], sizes = [8, 32], strides = [1, 1]} : vector<8x96xf32> to vector<8x32xf32>
    %351 = vector.extract_strided_slice %346 {offsets = [0, 64], sizes = [8, 32], strides = [1, 1]} : vector<8x96xf32> to vector<8x32xf32>
    %352 = arith.mulf %350, %333 : vector<8x32xf32>
    %353 = arith.mulf %349, %348 : vector<8x32xf32>
    %354 = arith.addf %352, %353 : vector<8x32xf32>
    %355 = math.tanh %354 : vector<8x32xf32>
    %356 = arith.mulf %351, %355 : vector<8x32xf32>
    %c56_111 = arith.constant 56 : index
    %c0_112 = arith.constant 0 : index
    %357 = vector.load %arg15[%c56_111, %c0_112] : memref<64x32xf32, #tpu.memory_space<vmem>>, vector<8x32xf32>
    tpu.vector_store %arg15[%c56_111, %c0_112], %356 {strides = array<i32>} : memref<64x32xf32, #tpu.memory_space<vmem>>, vector<8x32xf32>,
    %c0_113 = arith.constant 0 : index
    %c0_114 = arith.constant 0 : index
    %358 = vector.load %arg15[%c0_113, %c0_114] : memref<64x32xf32, #tpu.memory_space<vmem>>, vector<64x32xf32>
    %359 = arith.truncf %358 : vector<64x32xf32> to vector<64x32xbf16>
    %c0_115 = arith.constant 0 : index
    %c0_116 = arith.constant 0 : index
    %360 = vector.load %arg7[%c0_115, %c0_116] : memref<32x128xbf16, #tpu.memory_space<vmem>>, vector<32x128xbf16>
    %c0_117 = arith.constant 0 : index
    %c0_118 = arith.constant 0 : index
    %361 = vector.load %arg8[%c0_117, %c0_118] : memref<32x128xbf16, #tpu.memory_space<vmem>>, vector<32x128xbf16>
    %c0_119 = arith.constant 0 : index
    %c0_120 = arith.constant 0 : index
    %362 = vector.load %arg9[%c0_119, %c0_120] : memref<1x128xf32, #tpu.memory_space<vmem>>, vector<1x128xf32>
    %cst_121 = arith.constant dense<0.000000e+00> : vector<64x128xf32>
    %363 = tpu.matmul %359, %360, %cst_121 {dimension_numbers = #tpu.dot_dimension_numbers<[1], [0], [0], [1], [0, 0, 1, 1], [], []>} : vector<64x32xbf16>, vector<32x128xbf16>, vector<64x128xf32> -> vector<64x128xf32>
    %364 = vector.broadcast %362 : vector<1x128xf32> to vector<64x128xf32>
    %365 = arith.addf %363, %364 : vector<64x128xf32>
    %c0_122 = arith.constant 0 : index
    %c0_123 = arith.constant 0 : index
    %366 = vector.load %arg13[%c0_122, %c0_123] : memref<64x128xf32, #tpu.memory_space<vmem>>, vector<64x128xf32>
    tpu.vector_store %arg13[%c0_122, %c0_123], %365 {strides = array<i32>} : memref<64x128xf32, #tpu.memory_space<vmem>>, vector<64x128xf32>,
    %cst_124 = arith.constant 0.000000e+00 : f32
    %367 = vector.broadcast %cst_124 : f32 to vector<8x32xf32>
    %cst_125 = arith.constant 0.000000e+00 : f32
    %368 = vector.broadcast %cst_125 : f32 to vector<8x32xf32>
    %c0_126 = arith.constant 0 : index
    %c0_127 = arith.constant 0 : index
    %369 = vector.load %arg13[%c0_126, %c0_127] : memref<64x128xf32, #tpu.memory_space<vmem>>, vector<8x128xf32>
    %370 = arith.truncf %367 : vector<8x32xf32> to vector<8x32xbf16>
    %cst_128 = arith.constant dense<0.000000e+00> : vector<8x128xf32>
    %371 = tpu.matmul %370, %361, %cst_128 {dimension_numbers = #tpu.dot_dimension_numbers<[1], [0], [0], [1], [0, 0, 1, 1], [], []>} : vector<8x32xbf16>, vector<32x128xbf16>, vector<8x128xf32> -> vector<8x128xf32>
    %372 = arith.addf %369, %371 : vector<8x128xf32>
    %373 = vector.extract_strided_slice %372 {offsets = [0, 0], sizes = [8, 96], strides = [1, 1]} : vector<8x128xf32> to vector<8x96xf32>
    %374 = arith.negf %373 : vector<8x96xf32>
    %375 = math.exp %374 : vector<8x96xf32>
    %cst_129 = arith.constant 1.000000e+00 : f32
    %376 = vector.broadcast %cst_129 : f32 to vector<8x96xf32>
    %377 = arith.addf %376, %375 : vector<8x96xf32>
    %378 = arith.divf %376, %377 : vector<8x96xf32>
    %379 = vector.extract_strided_slice %372 {offsets = [0, 96], sizes = [8, 32], strides = [1, 1]} : vector<8x128xf32> to vector<8x32xf32>
    %380 = math.tanh %379 : vector<8x32xf32>
    %381 = vector.extract_strided_slice %378 {offsets = [0, 0], sizes = [8, 32], strides = [1, 1]} : vector<8x96xf32> to vector<8x32xf32>
    %382 = vector.extract_strided_slice %378 {offsets = [0, 32], sizes = [8, 32], strides = [1, 1]} : vector<8x96xf32> to vector<8x32xf32>
    %383 = vector.extract_strided_slice %378 {offsets = [0, 64], sizes = [8, 32], strides = [1, 1]} : vector<8x96xf32> to vector<8x32xf32>
    %384 = arith.mulf %382, %368 : vector<8x32xf32>
    %385 = arith.mulf %381, %380 : vector<8x32xf32>
    %386 = arith.addf %384, %385 : vector<8x32xf32>
    %387 = math.tanh %386 : vector<8x32xf32>
    %388 = arith.mulf %383, %387 : vector<8x32xf32>
    %c8_130 = arith.constant 8 : index
    %c0_131 = arith.constant 0 : index
    %389 = vector.load %arg13[%c8_130, %c0_131] : memref<64x128xf32, #tpu.memory_space<vmem>>, vector<8x128xf32>
    %390 = arith.truncf %388 : vector<8x32xf32> to vector<8x32xbf16>
    %cst_132 = arith.constant dense<0.000000e+00> : vector<8x128xf32>
    %391 = tpu.matmul %390, %361, %cst_132 {dimension_numbers = #tpu.dot_dimension_numbers<[1], [0], [0], [1], [0, 0, 1, 1], [], []>} : vector<8x32xbf16>, vector<32x128xbf16>, vector<8x128xf32> -> vector<8x128xf32>
    %392 = arith.addf %389, %391 : vector<8x128xf32>
    %393 = vector.extract_strided_slice %392 {offsets = [0, 0], sizes = [8, 96], strides = [1, 1]} : vector<8x128xf32> to vector<8x96xf32>
    %394 = arith.negf %393 : vector<8x96xf32>
    %395 = math.exp %394 : vector<8x96xf32>
    %cst_133 = arith.constant 1.000000e+00 : f32
    %396 = vector.broadcast %cst_133 : f32 to vector<8x96xf32>
    %397 = arith.addf %396, %395 : vector<8x96xf32>
    %398 = arith.divf %396, %397 : vector<8x96xf32>
    %399 = vector.extract_strided_slice %392 {offsets = [0, 96], sizes = [8, 32], strides = [1, 1]} : vector<8x128xf32> to vector<8x32xf32>
    %400 = math.tanh %399 : vector<8x32xf32>
    %401 = vector.extract_strided_slice %398 {offsets = [0, 0], sizes = [8, 32], strides = [1, 1]} : vector<8x96xf32> to vector<8x32xf32>
    %402 = vector.extract_strided_slice %398 {offsets = [0, 32], sizes = [8, 32], strides = [1, 1]} : vector<8x96xf32> to vector<8x32xf32>
    %403 = vector.extract_strided_slice %398 {offsets = [0, 64], sizes = [8, 32], strides = [1, 1]} : vector<8x96xf32> to vector<8x32xf32>
    %404 = arith.mulf %402, %386 : vector<8x32xf32>
    %405 = arith.mulf %401, %400 : vector<8x32xf32>
    %406 = arith.addf %404, %405 : vector<8x32xf32>
    %407 = math.tanh %406 : vector<8x32xf32>
    %408 = arith.mulf %403, %407 : vector<8x32xf32>
    %c16_134 = arith.constant 16 : index
    %c0_135 = arith.constant 0 : index
    %409 = vector.load %arg13[%c16_134, %c0_135] : memref<64x128xf32, #tpu.memory_space<vmem>>, vector<8x128xf32>
    %410 = arith.truncf %408 : vector<8x32xf32> to vector<8x32xbf16>
    %cst_136 = arith.constant dense<0.000000e+00> : vector<8x128xf32>
    %411 = tpu.matmul %410, %361, %cst_136 {dimension_numbers = #tpu.dot_dimension_numbers<[1], [0], [0], [1], [0, 0, 1, 1], [], []>} : vector<8x32xbf16>, vector<32x128xbf16>, vector<8x128xf32> -> vector<8x128xf32>
    %412 = arith.addf %409, %411 : vector<8x128xf32>
    %413 = vector.extract_strided_slice %412 {offsets = [0, 0], sizes = [8, 96], strides = [1, 1]} : vector<8x128xf32> to vector<8x96xf32>
    %414 = arith.negf %413 : vector<8x96xf32>
    %415 = math.exp %414 : vector<8x96xf32>
    %cst_137 = arith.constant 1.000000e+00 : f32
    %416 = vector.broadcast %cst_137 : f32 to vector<8x96xf32>
    %417 = arith.addf %416, %415 : vector<8x96xf32>
    %418 = arith.divf %416, %417 : vector<8x96xf32>
    %419 = vector.extract_strided_slice %412 {offsets = [0, 96], sizes = [8, 32], strides = [1, 1]} : vector<8x128xf32> to vector<8x32xf32>
    %420 = math.tanh %419 : vector<8x32xf32>
    %421 = vector.extract_strided_slice %418 {offsets = [0, 0], sizes = [8, 32], strides = [1, 1]} : vector<8x96xf32> to vector<8x32xf32>
    %422 = vector.extract_strided_slice %418 {offsets = [0, 32], sizes = [8, 32], strides = [1, 1]} : vector<8x96xf32> to vector<8x32xf32>
    %423 = vector.extract_strided_slice %418 {offsets = [0, 64], sizes = [8, 32], strides = [1, 1]} : vector<8x96xf32> to vector<8x32xf32>
    %424 = arith.mulf %422, %406 : vector<8x32xf32>
    %425 = arith.mulf %421, %420 : vector<8x32xf32>
    %426 = arith.addf %424, %425 : vector<8x32xf32>
    %427 = math.tanh %426 : vector<8x32xf32>
    %428 = arith.mulf %423, %427 : vector<8x32xf32>
    %c24_138 = arith.constant 24 : index
    %c0_139 = arith.constant 0 : index
    %429 = vector.load %arg13[%c24_138, %c0_139] : memref<64x128xf32, #tpu.memory_space<vmem>>, vector<8x128xf32>
    %430 = arith.truncf %428 : vector<8x32xf32> to vector<8x32xbf16>
    %cst_140 = arith.constant dense<0.000000e+00> : vector<8x128xf32>
    %431 = tpu.matmul %430, %361, %cst_140 {dimension_numbers = #tpu.dot_dimension_numbers<[1], [0], [0], [1], [0, 0, 1, 1], [], []>} : vector<8x32xbf16>, vector<32x128xbf16>, vector<8x128xf32> -> vector<8x128xf32>
    %432 = arith.addf %429, %431 : vector<8x128xf32>
    %433 = vector.extract_strided_slice %432 {offsets = [0, 0], sizes = [8, 96], strides = [1, 1]} : vector<8x128xf32> to vector<8x96xf32>
    %434 = arith.negf %433 : vector<8x96xf32>
    %435 = math.exp %434 : vector<8x96xf32>
    %cst_141 = arith.constant 1.000000e+00 : f32
    %436 = vector.broadcast %cst_141 : f32 to vector<8x96xf32>
    %437 = arith.addf %436, %435 : vector<8x96xf32>
    %438 = arith.divf %436, %437 : vector<8x96xf32>
    %439 = vector.extract_strided_slice %432 {offsets = [0, 96], sizes = [8, 32], strides = [1, 1]} : vector<8x128xf32> to vector<8x32xf32>
    %440 = math.tanh %439 : vector<8x32xf32>
    %441 = vector.extract_strided_slice %438 {offsets = [0, 0], sizes = [8, 32], strides = [1, 1]} : vector<8x96xf32> to vector<8x32xf32>
    %442 = vector.extract_strided_slice %438 {offsets = [0, 32], sizes = [8, 32], strides = [1, 1]} : vector<8x96xf32> to vector<8x32xf32>
    %443 = vector.extract_strided_slice %438 {offsets = [0, 64], sizes = [8, 32], strides = [1, 1]} : vector<8x96xf32> to vector<8x32xf32>
    %444 = arith.mulf %442, %426 : vector<8x32xf32>
    %445 = arith.mulf %441, %440 : vector<8x32xf32>
    %446 = arith.addf %444, %445 : vector<8x32xf32>
    %447 = math.tanh %446 : vector<8x32xf32>
    %448 = arith.mulf %443, %447 : vector<8x32xf32>
    %c32_142 = arith.constant 32 : index
    %c0_143 = arith.constant 0 : index
    %449 = vector.load %arg13[%c32_142, %c0_143] : memref<64x128xf32, #tpu.memory_space<vmem>>, vector<8x128xf32>
    %450 = arith.truncf %448 : vector<8x32xf32> to vector<8x32xbf16>
    %cst_144 = arith.constant dense<0.000000e+00> : vector<8x128xf32>
    %451 = tpu.matmul %450, %361, %cst_144 {dimension_numbers = #tpu.dot_dimension_numbers<[1], [0], [0], [1], [0, 0, 1, 1], [], []>} : vector<8x32xbf16>, vector<32x128xbf16>, vector<8x128xf32> -> vector<8x128xf32>
    %452 = arith.addf %449, %451 : vector<8x128xf32>
    %453 = vector.extract_strided_slice %452 {offsets = [0, 0], sizes = [8, 96], strides = [1, 1]} : vector<8x128xf32> to vector<8x96xf32>
    %454 = arith.negf %453 : vector<8x96xf32>
    %455 = math.exp %454 : vector<8x96xf32>
    %cst_145 = arith.constant 1.000000e+00 : f32
    %456 = vector.broadcast %cst_145 : f32 to vector<8x96xf32>
    %457 = arith.addf %456, %455 : vector<8x96xf32>
    %458 = arith.divf %456, %457 : vector<8x96xf32>
    %459 = vector.extract_strided_slice %452 {offsets = [0, 96], sizes = [8, 32], strides = [1, 1]} : vector<8x128xf32> to vector<8x32xf32>
    %460 = math.tanh %459 : vector<8x32xf32>
    %461 = vector.extract_strided_slice %458 {offsets = [0, 0], sizes = [8, 32], strides = [1, 1]} : vector<8x96xf32> to vector<8x32xf32>
    %462 = vector.extract_strided_slice %458 {offsets = [0, 32], sizes = [8, 32], strides = [1, 1]} : vector<8x96xf32> to vector<8x32xf32>
    %463 = vector.extract_strided_slice %458 {offsets = [0, 64], sizes = [8, 32], strides = [1, 1]} : vector<8x96xf32> to vector<8x32xf32>
    %464 = arith.mulf %462, %446 : vector<8x32xf32>
    %465 = arith.mulf %461, %460 : vector<8x32xf32>
    %466 = arith.addf %464, %465 : vector<8x32xf32>
    %467 = math.tanh %466 : vector<8x32xf32>
    %468 = arith.mulf %463, %467 : vector<8x32xf32>
    %c40_146 = arith.constant 40 : index
    %c0_147 = arith.constant 0 : index
    %469 = vector.load %arg13[%c40_146, %c0_147] : memref<64x128xf32, #tpu.memory_space<vmem>>, vector<8x128xf32>
    %470 = arith.truncf %468 : vector<8x32xf32> to vector<8x32xbf16>
    %cst_148 = arith.constant dense<0.000000e+00> : vector<8x128xf32>
    %471 = tpu.matmul %470, %361, %cst_148 {dimension_numbers = #tpu.dot_dimension_numbers<[1], [0], [0], [1], [0, 0, 1, 1], [], []>} : vector<8x32xbf16>, vector<32x128xbf16>, vector<8x128xf32> -> vector<8x128xf32>
    %472 = arith.addf %469, %471 : vector<8x128xf32>
    %473 = vector.extract_strided_slice %472 {offsets = [0, 0], sizes = [8, 96], strides = [1, 1]} : vector<8x128xf32> to vector<8x96xf32>
    %474 = arith.negf %473 : vector<8x96xf32>
    %475 = math.exp %474 : vector<8x96xf32>
    %cst_149 = arith.constant 1.000000e+00 : f32
    %476 = vector.broadcast %cst_149 : f32 to vector<8x96xf32>
    %477 = arith.addf %476, %475 : vector<8x96xf32>
    %478 = arith.divf %476, %477 : vector<8x96xf32>
    %479 = vector.extract_strided_slice %472 {offsets = [0, 96], sizes = [8, 32], strides = [1, 1]} : vector<8x128xf32> to vector<8x32xf32>
    %480 = math.tanh %479 : vector<8x32xf32>
    %481 = vector.extract_strided_slice %478 {offsets = [0, 0], sizes = [8, 32], strides = [1, 1]} : vector<8x96xf32> to vector<8x32xf32>
    %482 = vector.extract_strided_slice %478 {offsets = [0, 32], sizes = [8, 32], strides = [1, 1]} : vector<8x96xf32> to vector<8x32xf32>
    %483 = vector.extract_strided_slice %478 {offsets = [0, 64], sizes = [8, 32], strides = [1, 1]} : vector<8x96xf32> to vector<8x32xf32>
    %484 = arith.mulf %482, %466 : vector<8x32xf32>
    %485 = arith.mulf %481, %480 : vector<8x32xf32>
    %486 = arith.addf %484, %485 : vector<8x32xf32>
    %487 = math.tanh %486 : vector<8x32xf32>
    %488 = arith.mulf %483, %487 : vector<8x32xf32>
    %c48_150 = arith.constant 48 : index
    %c0_151 = arith.constant 0 : index
    %489 = vector.load %arg13[%c48_150, %c0_151] : memref<64x128xf32, #tpu.memory_space<vmem>>, vector<8x128xf32>
    %490 = arith.truncf %488 : vector<8x32xf32> to vector<8x32xbf16>
    %cst_152 = arith.constant dense<0.000000e+00> : vector<8x128xf32>
    %491 = tpu.matmul %490, %361, %cst_152 {dimension_numbers = #tpu.dot_dimension_numbers<[1], [0], [0], [1], [0, 0, 1, 1], [], []>} : vector<8x32xbf16>, vector<32x128xbf16>, vector<8x128xf32> -> vector<8x128xf32>
    %492 = arith.addf %489, %491 : vector<8x128xf32>
    %493 = vector.extract_strided_slice %492 {offsets = [0, 0], sizes = [8, 96], strides = [1, 1]} : vector<8x128xf32> to vector<8x96xf32>
    %494 = arith.negf %493 : vector<8x96xf32>
    %495 = math.exp %494 : vector<8x96xf32>
    %cst_153 = arith.constant 1.000000e+00 : f32
    %496 = vector.broadcast %cst_153 : f32 to vector<8x96xf32>
    %497 = arith.addf %496, %495 : vector<8x96xf32>
    %498 = arith.divf %496, %497 : vector<8x96xf32>
    %499 = vector.extract_strided_slice %492 {offsets = [0, 96], sizes = [8, 32], strides = [1, 1]} : vector<8x128xf32> to vector<8x32xf32>
    %500 = math.tanh %499 : vector<8x32xf32>
    %501 = vector.extract_strided_slice %498 {offsets = [0, 0], sizes = [8, 32], strides = [1, 1]} : vector<8x96xf32> to vector<8x32xf32>
    %502 = vector.extract_strided_slice %498 {offsets = [0, 32], sizes = [8, 32], strides = [1, 1]} : vector<8x96xf32> to vector<8x32xf32>
    %503 = vector.extract_strided_slice %498 {offsets = [0, 64], sizes = [8, 32], strides = [1, 1]} : vector<8x96xf32> to vector<8x32xf32>
    %504 = arith.mulf %502, %486 : vector<8x32xf32>
    %505 = arith.mulf %501, %500 : vector<8x32xf32>
    %506 = arith.addf %504, %505 : vector<8x32xf32>
    %507 = math.tanh %506 : vector<8x32xf32>
    %508 = arith.mulf %503, %507 : vector<8x32xf32>
    %c56_154 = arith.constant 56 : index
    %c0_155 = arith.constant 0 : index
    %509 = vector.load %arg13[%c56_154, %c0_155] : memref<64x128xf32, #tpu.memory_space<vmem>>, vector<8x128xf32>
    %510 = arith.truncf %508 : vector<8x32xf32> to vector<8x32xbf16>
    %cst_156 = arith.constant dense<0.000000e+00> : vector<8x128xf32>
    %511 = tpu.matmul %510, %361, %cst_156 {dimension_numbers = #tpu.dot_dimension_numbers<[1], [0], [0], [1], [0, 0, 1, 1], [], []>} : vector<8x32xbf16>, vector<32x128xbf16>, vector<8x128xf32> -> vector<8x128xf32>
    %512 = arith.addf %509, %511 : vector<8x128xf32>
    %513 = vector.extract_strided_slice %512 {offsets = [0, 0], sizes = [8, 96], strides = [1, 1]} : vector<8x128xf32> to vector<8x96xf32>
    %514 = arith.negf %513 : vector<8x96xf32>
    %515 = math.exp %514 : vector<8x96xf32>
    %cst_157 = arith.constant 1.000000e+00 : f32
    %516 = vector.broadcast %cst_157 : f32 to vector<8x96xf32>
    %517 = arith.addf %516, %515 : vector<8x96xf32>
    %518 = arith.divf %516, %517 : vector<8x96xf32>
    %519 = vector.extract_strided_slice %512 {offsets = [0, 96], sizes = [8, 32], strides = [1, 1]} : vector<8x128xf32> to vector<8x32xf32>
    %520 = math.tanh %519 : vector<8x32xf32>
    %521 = vector.extract_strided_slice %518 {offsets = [0, 0], sizes = [8, 32], strides = [1, 1]} : vector<8x96xf32> to vector<8x32xf32>
    %522 = vector.extract_strided_slice %518 {offsets = [0, 32], sizes = [8, 32], strides = [1, 1]} : vector<8x96xf32> to vector<8x32xf32>
    %523 = vector.extract_strided_slice %518 {offsets = [0, 64], sizes = [8, 32], strides = [1, 1]} : vector<8x96xf32> to vector<8x32xf32>
    %524 = arith.mulf %522, %506 : vector<8x32xf32>
    %525 = arith.mulf %521, %520 : vector<8x32xf32>
    %526 = arith.addf %524, %525 : vector<8x32xf32>
    %527 = math.tanh %526 : vector<8x32xf32>
    %528 = arith.mulf %523, %527 : vector<8x32xf32>
    %529 = arith.truncf %528 : vector<8x32xf32> to vector<8x32xbf16>
    %c0_158 = arith.constant 0 : index
    %c0_159 = arith.constant 0 : index
    %530 = vector.load %arg10[%c0_158, %c0_159] : memref<32x128xbf16, #tpu.memory_space<vmem>>, vector<32x128xbf16>
    %cst_160 = arith.constant dense<0.000000e+00> : vector<8x128xf32>
    %531 = tpu.matmul %529, %530, %cst_160 {dimension_numbers = #tpu.dot_dimension_numbers<[1], [0], [0], [1], [0, 0, 1, 1], [], []>} : vector<8x32xbf16>, vector<32x128xbf16>, vector<8x128xf32> -> vector<8x128xf32>
    %c0_161 = arith.constant 0 : index
    %c0_162 = arith.constant 0 : index
    %532 = vector.load %arg11[%c0_161, %c0_162] : memref<1x128xf32, #tpu.memory_space<vmem>>, vector<1x128xf32>
    %533 = vector.broadcast %532 : vector<1x128xf32> to vector<8x128xf32>
    %534 = arith.addf %531, %533 : vector<8x128xf32>
    %c0_163 = arith.constant 0 : index
    %c0_164 = arith.constant 0 : index
    %535 = vector.load %arg12[%c0_163, %c0_164] : memref<8x128xf32, #tpu.memory_space<vmem>>, vector<8x128xf32>
    tpu.vector_store %arg12[%c0_163, %c0_164], %534 {strides = array<i32>} : memref<8x128xf32, #tpu.memory_space<vmem>>, vector<8x128xf32>,
    return
  }
}

</mosaic_0001>

<llo_original>
// kernel: encoder_forward.1
$region0: #{encoder_forward.1}
  #allocation0 [shape = 'u32[]', space=smem, size = 0x4, offset = 0x4, fixed_abs, tag = 'smem constant byte address 0x4 - core index']
  #allocation1 [shape = 'u32[72,128]{1,0:T(1,128)}', space=vmem, size = 0x9000, scoped, tag = 'internal scratch']
  #allocation2 [shape = 'f32[64,128]{1,0:T(8,128)}', space=vmem, size = 0x8000, scoped, tag = 'scratch operand']
  #allocation3 [shape = 'f32[64,32]{1,0:T(8,128)}', space=vmem, size = 0x8000, scoped, tag = 'scratch operand']
  #allocation4 [shape = 'f32[64,32]{1,0:T(8,128)}', space=vmem, size = 0x8000, scoped, tag = 'scratch operand']
  %s0 = inlined_call_operand.vmem [shape: f32[64,4], index: 0, kind: input, shape index: {}]
  %s1 = inlined_call_operand.vmem [shape: bf16[4,128], index: 1, kind: input, shape index: {}]
  %s2 = inlined_call_operand.vmem [shape: bf16[32,128], index: 2, kind: input, shape index: {}]
  %s3 = inlined_call_operand.vmem [shape: f32[1,128], index: 3, kind: input, shape index: {}]
  %s4 = inlined_call_operand.vmem [shape: bf16[32,128], index: 4, kind: input, shape index: {}]
  %s5 = inlined_call_operand.vmem [shape: bf16[32,128], index: 5, kind: input, shape index: {}]
  %s6 = inlined_call_operand.vmem [shape: f32[1,128], index: 6, kind: input, shape index: {}]
  %s7 = inlined_call_operand.vmem [shape: bf16[32,128], index: 7, kind: input, shape index: {}]
  %s8 = inlined_call_operand.vmem [shape: bf16[32,128], index: 8, kind: input, shape index: {}]
  %s9 = inlined_call_operand.vmem [shape: f32[1,128], index: 9, kind: input, shape index: {}]
  %s10 = inlined_call_operand.vmem [shape: bf16[32,128], index: 10, kind: input, shape index: {}]
  %s11 = inlined_call_operand.vmem [shape: f32[1,128], index: 11, kind: input, shape index: {}]
  %s12 = inlined_call_operand.vmem [shape: f32[8,128], index: 12, kind: output, shape index: {}]
  %s13 = sld [smem:[#allocation0]]
  $region58: #{encoder_forward.1} parent=0
    _
  %s15 = ssub.s32 1, %s13
  %s16 = scalar_select 0, %s15, %s13
  // Predicated region
  $region2: #{encoder_forward.1} parent=0 // pred_check
    _
  $region3: #{encoder_forward.1} parent=0 // pred_check_branch
    %18 = sbr.rel (0) target = $region5
  $region4: #{encoder_forward.1} parent=0 // pred_region
    _
  $region5: #{encoder_forward.1} parent=0 // pred_fallthru
    _
  // Predicated region
  $region6: #{encoder_forward.1} parent=0 // pred_check
    _
  $region7: #{encoder_forward.1} parent=0 // pred_check_branch
    %20 = sbr.rel (0) target = $region9
  $region8: #{encoder_forward.1} parent=0 // pred_region
    _
  $region9: #{encoder_forward.1} parent=0 // pred_fallthru
    _
  // Predicated region
  $region10: #{encoder_forward.1} parent=0 // pred_check
    _
  $region11: #{encoder_forward.1} parent=0 // pred_check_branch
    %22 = sbr.rel (0) target = $region13
  $region12: #{encoder_forward.1} parent=0 // pred_region
    _
  $region13: #{encoder_forward.1} parent=0 // pred_fallthru
    _
  // Predicated region
  $region14: #{encoder_forward.1} parent=0 // pred_check
    _
  $region15: #{encoder_forward.1} parent=0 // pred_check_branch
    %24 = sbr.rel (0) target = $region17
  $region16: #{encoder_forward.1} parent=0 // pred_region
    _
  $region17: #{encoder_forward.1} parent=0 // pred_fallthru
    _
  // Predicated region
  $region18: #{encoder_forward.1} parent=0 // pred_check
    _
  $region19: #{encoder_forward.1} parent=0 // pred_check_branch
    %26 = sbr.rel (0) target = $region21
  $region20: #{encoder_forward.1} parent=0 // pred_region
    _
  $region21: #{encoder_forward.1} parent=0 // pred_fallthru
    _
  // Predicated region
  $region22: #{encoder_forward.1} parent=0 // pred_check
    _
  $region23: #{encoder_forward.1} parent=0 // pred_check_branch
    %28 = sbr.rel (0) target = $region25
  $region24: #{encoder_forward.1} parent=0 // pred_region
    _
  $region25: #{encoder_forward.1} parent=0 // pred_fallthru
    _
  // Predicated region
  $region26: #{encoder_forward.1} parent=0 // pred_check
    _
  $region27: #{encoder_forward.1} parent=0 // pred_check_branch
    %30 = sbr.rel (0) target = $region29
  $region28: #{encoder_forward.1} parent=0 // pred_region
    _
  $region29: #{encoder_forward.1} parent=0 // pred_fallthru
    _
  // Predicated region
  $region30: #{encoder_forward.1} parent=0 // pred_check
    _
  $region31: #{encoder_forward.1} parent=0 // pred_check_branch
    %32 = sbr.rel (0) target = $region33
  $region32: #{encoder_forward.1} parent=0 // pred_region
    _
  $region33: #{encoder_forward.1} parent=0 // pred_fallthru
    _
  // Predicated region
  $region34: #{encoder_forward.1} parent=0 // pred_check
    _
  $region35: #{encoder_forward.1} parent=0 // pred_check_branch
    %34 = sbr.rel (0) target = $region37
  $region36: #{encoder_forward.1} parent=0 // pred_region
    _
  $region37: #{encoder_forward.1} parent=0 // pred_fallthru
    _
  // Predicated region
  $region38: #{encoder_forward.1} parent=0 // pred_check
    _
  $region39: #{encoder_forward.1} parent=0 // pred_check_branch
    %36 = sbr.rel (0) target = $region41
  $region40: #{encoder_forward.1} parent=0 // pred_region
    _
  $region41: #{encoder_forward.1} parent=0 // pred_fallthru
    _
  // Predicated region
  $region42: #{encoder_forward.1} parent=0 // pred_check
    _
  $region43: #{encoder_forward.1} parent=0 // pred_check_branch
    %38 = sbr.rel (0) target = $region45
  $region44: #{encoder_forward.1} parent=0 // pred_region
    _
  $region45: #{encoder_forward.1} parent=0 // pred_fallthru
    _
  // Predicated region
  $region46: #{encoder_forward.1} parent=0 // pred_check
    _
  $region47: #{encoder_forward.1} parent=0 // pred_check_branch
    %40 = sbr.rel (0) target = $region49
  $region48: #{encoder_forward.1} parent=0 // pred_region
    _
  $region49: #{encoder_forward.1} parent=0 // pred_fallthru
    _
  %v42 = vld [vmem:[%s0] sm:$0xff]
  %v43 = vld [vmem:[%s0 + $0x8] sm:$0xff]
  %v44 = vld [vmem:[%s0 + $0x10] sm:$0xff]
  %v45 = vld [vmem:[%s0 + $0x18] sm:$0xff]
  %v46 = vld [vmem:[%s0 + $0x20] sm:$0xff]
  %v47 = vld [vmem:[%s0 + $0x28] sm:$0xff]
  %v48 = vld [vmem:[%s0 + $0x30] sm:$0xff]
  %v49 = vld [vmem:[%s0 + $0x38] sm:$0xff]
  %v50 = vpack.c.bf16 %v43, %v42
  %v51 = vpack.c.bf16 %v45, %v44
  %v52 = vpack.c.bf16 %v47, %v46
  %v53 = vpack.c.bf16 %v49, %v48
  %v54 = vld [vmem:[%s1] sm:$0x3]
  %v55 = vld [vmem:[%s2] sm:$0xf]
  %v56 = vld [vmem:[%s2 + $0x4] sm:$0xf]
  %v57 = vld [vmem:[%s2 + $0x8] sm:$0xf]
  %v58 = vld [vmem:[%s2 + $0xc] sm:$0xf]
  %v59 = vld [vmem:[%s3] sm:$0x1]
  %v61 = vperm.slane %v59, 0
  %vm63 = vcmask 31744
  %v65 = vsel %vm63, %v50, 0
  %v68 = vsel %vm63, %v51, 0
  %v71 = vsel %vm63, %v52, 0
  %v74 = vsel %vm63, %v53, 0
  %vm76 = vcmask 1041408
  %v78 = vsel %vm76, %v54, 0
  %80 = vmatpush.bf16.msra.mxu0 0
  %81 = vmatpush.bf16.msra.mxu0 0
  %82 = vmatpush.bf16.msra.mxu0 0
  %83 = vmatpush.bf16.msra.mxu0 0
  %84 = vmatpush.bf16.msra.mxu0 0
  %85 = vmatpush.bf16.msra.mxu0 0
  %86 = vmatpush.bf16.msra.mxu0 0
  %87 = vmatpush.bf16.msra.mxu0 %v78
  %88 = vmatmul.bf16.gmra.mxu0 %v65
  %v89 = vpop.f32.mrf.mxu0
  %v90 = vadd.f32 %v61, %v89
  %v91 = vpop.f32.mrf.mxu0
  %v92 = vadd.f32 %v61, %v91
  %93 = vmatmul.bf16.gmra.mxu0 %v68
  %v94 = vpop.f32.mrf.mxu0
  %v95 = vadd.f32 %v61, %v94
  %v96 = vpop.f32.mrf.mxu0
  %v97 = vadd.f32 %v61, %v96
  %98 = vmatmul.bf16.gmra.mxu0 %v71
  %v99 = vpop.f32.mrf.mxu0
  %v100 = vadd.f32 %v61, %v99
  %v101 = vpop.f32.mrf.mxu0
  %v102 = vadd.f32 %v61, %v101
  %103 = vmatmul.bf16.gmra.mxu0 %v74
  %v104 = vpop.f32.mrf.mxu0
  %v105 = vadd.f32 %v61, %v104
  %v106 = vpop.f32.mrf.mxu0
  %v107 = vadd.f32 %v61, %v106
  %108 = vdwg.mxu0
  %109 = vst [vmem:[#allocation2] sm:$0xff] %v90
  %110 = vst [vmem:[#allocation2 + $0x8] sm:$0xff] %v92
  %111 = vst [vmem:[#allocation2 + $0x10] sm:$0xff] %v95
  %112 = vst [vmem:[#allocation2 + $0x18] sm:$0xff] %v97
  %113 = vst [vmem:[#allocation2 + $0x20] sm:$0xff] %v100
  %114 = vst [vmem:[#allocation2 + $0x28] sm:$0xff] %v102
  %115 = vst [vmem:[#allocation2 + $0x30] sm:$0xff] %v105
  %116 = vst [vmem:[#allocation2 + $0x38] sm:$0xff] %v107
  %v117 = vld [vmem:[#allocation2] sm:$0xff]
  %v122 = vunpack.c.l.b16 %v55
  %v123 = vunpack.c.l.b16 %v56
  %v124 = vunpack.c.l.b16 %v57
  %v125 = vunpack.c.l.b16 %v58
  %v126 = vpack.c.b16 %v123, %v122
  %v127 = vpack.c.b16 %v125, %v124
  %vm130 = vcmask 261120
  %v132 = vsel %vm130, 0, 0
  %134 = vmatpush.bf16.msra.mxu0 0
  %135 = vmatpush.bf16.msra.mxu0 0
  %136 = vmatpush.bf16.msra.mxu0 0
  %137 = vmatpush.bf16.msra.mxu0 0
  %138 = vmatpush.bf16.msra.mxu0 0
  %139 = vmatpush.bf16.msra.mxu0 0
  %140 = vmatpush.bf16.msra.mxu0 %v127
  %141 = vmatpush.bf16.msra.mxu0 %v126
  %142 = vmatmul.bf16.gmra.mxu0 %v132
  %v143 = vpop.f32.mrf.mxu0
  %v144 = vadd.f32 0.0, %v143
  %v145 = vpop.f32.mrf.mxu0
  %146 = vdwg.mxu0
  %v147 = vadd.f32 %v117, %v144
  %v148 = vxor.u32 %v147, 2147483648
  %v149 = vmul.f32 %v148, 1.442695
  %v150 = vpow.pop %v149
  %v151 = vadd.f32 %v150, 1.0
  %v152 = vrcp.pop %v151
  %v153 = vmul.f32 %v151, %v152
  %v154 = vsub.f32 1.0, %v153
  %v155 = vmul.f32 %v152, %v154
  %v156 = vadd.f32 %v152, %v155
  %vm157 = vweird.f32 %v151
  %vm158 = vweird.f32 %v152
  %vm159 = vmor %vm157, %vm158
  %v160 = vsel %vm159, %v152, %v156
  %v161 = vand.u32 2147483647, %v151
  %vm162 = vcmp.eq.f32.partialorder %v161, 8.507059e+37
  %v163 = vand.u32 %v151, 2147483648
  %v164 = vor.u32 1.1754944e-38, %v163
  %v165 = vsel %vm162, %v164, %v160
  %v166 = vmul.f32 1.0, %v165
  %v167 = vtanh.pop %v147
  %v168 = vmul.f32 %v166, 0.0
  %170 = vrot.lane.b32.xlu0 %v167, 32
  %v171 = vpop.permute.xlu0 %170
  %v173 = vmul.f32 %v166, %v171
  %175 = vrot.lane.b32.xlu0 %v173, 32
  %v176 = vpop.permute.xlu0 %175
  %v178 = vadd.f32 %v168, %v176
  %v179 = vtanh.pop %v178
  %181 = vrot.lane.b32.xlu0 %v179, 32
  %v182 = vpop.permute.xlu0 %181
  %v184 = vmul.f32 %v166, %v182
  %186 = vrot.lane.b32.xlu0 %v184, 64
  %v187 = vpop.permute.xlu0 %186
  %189 = vst.msk [vmem:[#allocation3] sm:$0xff] %vm130, %v187
  %v190 = vld [vmem:[#allocation2 + $0x8] sm:$0xff]
  %v191 = vpack.c.bf16 %v184, %v184
  %193 = vrot.lane.b32.xlu0 %v191, 64
  %v194 = vpop.permute.xlu0 %193
  %v196 = vsel %vm130, %v194, 0
  %198 = vmatpush.bf16.msra.mxu0 0
  %199 = vmatpush.bf16.msra.mxu0 0
  %200 = vmatpush.bf16.msra.mxu0 0
  %201 = vmatpush.bf16.msra.mxu0 0
  %202 = vmatpush.bf16.msra.mxu0 0
  %203 = vmatpush.bf16.msra.mxu0 0
  %204 = vmatpush.bf16.msra.mxu0 %v127
  %205 = vmatpush.bf16.msra.mxu0 %v126
  %206 = vmatmul.bf16.gmra.mxu0 %v196
  %v207 = vpop.f32.mrf.mxu0
  %v208 = vadd.f32 0.0, %v207
  %v209 = vpop.f32.mrf.mxu0
  %210 = vdwg.mxu0
  %v211 = vadd.f32 %v190, %v208
  %v212 = vxor.u32 %v211, 2147483648
  %v213 = vmul.f32 %v212, 1.442695
  %v214 = vpow.pop %v213
  %v215 = vadd.f32 %v214, 1.0
  %v216 = vrcp.pop %v215
  %v217 = vmul.f32 %v215, %v216
  %v218 = vsub.f32 1.0, %v217
  %v219 = vmul.f32 %v216, %v218
  %v220 = vadd.f32 %v216, %v219
  %vm221 = vweird.f32 %v215
  %vm222 = vweird.f32 %v216
  %vm223 = vmor %vm221, %vm222
  %v224 = vsel %vm223, %v216, %v220
  %v225 = vand.u32 2147483647, %v215
  %vm226 = vcmp.eq.f32.partialorder %v225, 8.507059e+37
  %v227 = vand.u32 %v215, 2147483648
  %v228 = vor.u32 1.1754944e-38, %v227
  %v229 = vsel %vm226, %v228, %v224
  %v230 = vmul.f32 1.0, %v229
  %v231 = vtanh.pop %v211
  %v232 = vmul.f32 %v230, %v178
  %234 = vrot.lane.b32.xlu0 %v231, 32
  %v235 = vpop.permute.xlu0 %234
  %v237 = vmul.f32 %v230, %v235
  %239 = vrot.lane.b32.xlu0 %v237, 32
  %v240 = vpop.permute.xlu0 %239
  %v242 = vadd.f32 %v232, %v240
  %v243 = vtanh.pop %v242
  %245 = vrot.lane.b32.xlu0 %v243, 32
  %v246 = vpop.permute.xlu0 %245
  %v248 = vmul.f32 %v230, %v246
  %250 = vrot.lane.b32.xlu0 %v248, 64
  %v251 = vpop.permute.xlu0 %250
  %253 = vst.msk [vmem:[#allocation3 + $0x8] sm:$0xff] %vm130, %v251
  %v254 = vld [vmem:[#allocation2 + $0x10] sm:$0xff]
  %v255 = vpack.c.bf16 %v248, %v248
  %257 = vrot.lane.b32.xlu0 %v255, 64
  %v258 = vpop.permute.xlu0 %257
  %v260 = vsel %vm130, %v258, 0
  %262 = vmatpush.bf16.msra.mxu0 0
  %263 = vmatpush.bf16.msra.mxu0 0
  %264 = vmatpush.bf16.msra.mxu0 0
  %265 = vmatpush.bf16.msra.mxu0 0
  %266 = vmatpush.bf16.msra.mxu0 0
  %267 = vmatpush.bf16.msra.mxu0 0
  %268 = vmatpush.bf16.msra.mxu0 %v127
  %269 = vmatpush.bf16.msra.mxu0 %v126
  %270 = vmatmul.bf16.gmra.mxu0 %v260
  %v271 = vpop.f32.mrf.mxu0
  %v272 = vadd.f32 0.0, %v271
  %v273 = vpop.f32.mrf.mxu0
  %274 = vdwg.mxu0
  %v275 = vadd.f32 %v254, %v272
  %v276 = vxor.u32 %v275, 2147483648
  %v277 = vmul.f32 %v276, 1.442695
  %v278 = vpow.pop %v277
  %v279 = vadd.f32 %v278, 1.0
  %v280 = vrcp.pop %v279
  %v281 = vmul.f32 %v279, %v280
  %v282 = vsub.f32 1.0, %v281
  %v283 = vmul.f32 %v280, %v282
  %v284 = vadd.f32 %v280, %v283
  %vm285 = vweird.f32 %v279
  %vm286 = vweird.f32 %v280
  %vm287 = vmor %vm285, %vm286
  %v288 = vsel %vm287, %v280, %v284
  %v289 = vand.u32 2147483647, %v279
  %vm290 = vcmp.eq.f32.partialorder %v289, 8.507059e+37
  %v291 = vand.u32 %v279, 2147483648
  %v292 = vor.u32 1.1754944e-38, %v291
  %v293 = vsel %vm290, %v292, %v288
  %v294 = vmul.f32 1.0, %v293
  %v295 = vtanh.pop %v275
  %v296 = vmul.f32 %v294, %v242
  %298 = vrot.lane.b32.xlu0 %v295, 32
  %v299 = vpop.permute.xlu0 %298
  %v301 = vmul.f32 %v294, %v299
  %303 = vrot.lane.b32.xlu0 %v301, 32
  %v304 = vpop.permute.xlu0 %303
  %v306 = vadd.f32 %v296, %v304
  %v307 = vtanh.pop %v306
  %309 = vrot.lane.b32.xlu0 %v307, 32
  %v310 = vpop.permute.xlu0 %309
  %v312 = vmul.f32 %v294, %v310
  %314 = vrot.lane.b32.xlu0 %v312, 64
  %v315 = vpop.permute.xlu0 %314
  %317 = vst.msk [vmem:[#allocation3 + $0x10] sm:$0xff] %vm130, %v315
  %v318 = vld [vmem:[#allocation2 + $0x18] sm:$0xff]
  %v319 = vpack.c.bf16 %v312, %v312
  %321 = vrot.lane.b32.xlu0 %v319, 64
  %v322 = vpop.permute.xlu0 %321
  %v324 = vsel %vm130, %v322, 0
  %326 = vmatpush.bf16.msra.mxu0 0
  %327 = vmatpush.bf16.msra.mxu0 0
  %328 = vmatpush.bf16.msra.mxu0 0
  %329 = vmatpush.bf16.msra.mxu0 0
  %330 = vmatpush.bf16.msra.mxu0 0
  %331 = vmatpush.bf16.msra.mxu0 0
  %332 = vmatpush.bf16.msra.mxu0 %v127
  %333 = vmatpush.bf16.msra.mxu0 %v126
  %334 = vmatmul.bf16.gmra.mxu0 %v324
  %v335 = vpop.f32.mrf.mxu0
  %v336 = vadd.f32 0.0, %v335
  %v337 = vpop.f32.mrf.mxu0
  %338 = vdwg.mxu0
  %v339 = vadd.f32 %v318, %v336
  %v340 = vxor.u32 %v339, 2147483648
  %v341 = vmul.f32 %v340, 1.442695
  %v342 = vpow.pop %v341
  %v343 = vadd.f32 %v342, 1.0
  %v344 = vrcp.pop %v343
  %v345 = vmul.f32 %v343, %v344
  %v346 = vsub.f32 1.0, %v345
  %v347 = vmul.f32 %v344, %v346
  %v348 = vadd.f32 %v344, %v347
  %vm349 = vweird.f32 %v343
  %vm350 = vweird.f32 %v344
  %vm351 = vmor %vm349, %vm350
  %v352 = vsel %vm351, %v344, %v348
  %v353 = vand.u32 2147483647, %v343
  %vm354 = vcmp.eq.f32.partialorder %v353, 8.507059e+37
  %v355 = vand.u32 %v343, 2147483648
  %v356 = vor.u32 1.1754944e-38, %v355
  %v357 = vsel %vm354, %v356, %v352
  %v358 = vmul.f32 1.0, %v357
  %v359 = vtanh.pop %v339
  %v360 = vmul.f32 %v358, %v306
  %362 = vrot.lane.b32.xlu0 %v359, 32
  %v363 = vpop.permute.xlu0 %362
  %v365 = vmul.f32 %v358, %v363
  %367 = vrot.lane.b32.xlu0 %v365, 32
  %v368 = vpop.permute.xlu0 %367
  %v370 = vadd.f32 %v360, %v368
  %v371 = vtanh.pop %v370
  %373 = vrot.lane.b32.xlu0 %v371, 32
  %v374 = vpop.permute.xlu0 %373
  %v376 = vmul.f32 %v358, %v374
  %378 = vrot.lane.b32.xlu0 %v376, 64
  %v379 = vpop.permute.xlu0 %378
  %381 = vst.msk [vmem:[#allocation3 + $0x18] sm:$0xff] %vm130, %v379
  %v382 = vld [vmem:[#allocation2 + $0x20] sm:$0xff]
  %v383 = vpack.c.bf16 %v376, %v376
  %385 = vrot.lane.b32.xlu0 %v383, 64
  %v386 = vpop.permute.xlu0 %385
  %v388 = vsel %vm130, %v386, 0
  %390 = vmatpush.bf16.msra.mxu0 0
  %391 = vmatpush.bf16.msra.mxu0 0
  %392 = vmatpush.bf16.msra.mxu0 0
  %393 = vmatpush.bf16.msra.mxu0 0
  %394 = vmatpush.bf16.msra.mxu0 0
  %395 = vmatpush.bf16.msra.mxu0 0
  %396 = vmatpush.bf16.msra.mxu0 %v127
  %397 = vmatpush.bf16.msra.mxu0 %v126
  %398 = vmatmul.bf16.gmra.mxu0 %v388
  %v399 = vpop.f32.mrf.mxu0
  %v400 = vadd.f32 0.0, %v399
  %v401 = vpop.f32.mrf.mxu0
  %402 = vdwg.mxu0
  %v403 = vadd.f32 %v382, %v400
  %v404 = vxor.u32 %v403, 2147483648
  %v405 = vmul.f32 %v404, 1.442695
  %v406 = vpow.pop %v405
  %v407 = vadd.f32 %v406, 1.0
  %v408 = vrcp.pop %v407
  %v409 = vmul.f32 %v407, %v408
  %v410 = vsub.f32 1.0, %v409
  %v411 = vmul.f32 %v408, %v410
  %v412 = vadd.f32 %v408, %v411
  %vm413 = vweird.f32 %v407
  %vm414 = vweird.f32 %v408
  %vm415 = vmor %vm413, %vm414
  %v416 = vsel %vm415, %v408, %v412
  %v417 = vand.u32 2147483647, %v407
  %vm418 = vcmp.eq.f32.partialorder %v417, 8.507059e+37
  %v419 = vand.u32 %v407, 2147483648
  %v420 = vor.u32 1.1754944e-38, %v419
  %v421 = vsel %vm418, %v420, %v416
  %v422 = vmul.f32 1.0, %v421
  %v423 = vtanh.pop %v403
  %v424 = vmul.f32 %v422, %v370
  %426 = vrot.lane.b32.xlu0 %v423, 32
  %v427 = vpop.permute.xlu0 %426
  %v429 = vmul.f32 %v422, %v427
  %431 = vrot.lane.b32.xlu0 %v429, 32
  %v432 = vpop.permute.xlu0 %431
  %v434 = vadd.f32 %v424, %v432
  %v435 = vtanh.pop %v434
  %437 = vrot.lane.b32.xlu0 %v435, 32
  %v438 = vpop.permute.xlu0 %437
  %v440 = vmul.f32 %v422, %v438
  %442 = vrot.lane.b32.xlu0 %v440, 64
  %v443 = vpop.permute.xlu0 %442
  %445 = vst.msk [vmem:[#allocation3 + $0x20] sm:$0xff] %vm130, %v443
  %v446 = vld [vmem:[#allocation2 + $0x28] sm:$0xff]
  %v447 = vpack.c.bf16 %v440, %v440
  %449 = vrot.lane.b32.xlu0 %v447, 64
  %v450 = vpop.permute.xlu0 %449
  %v452 = vsel %vm130, %v450, 0
  %454 = vmatpush.bf16.msra.mxu0 0
  %455 = vmatpush.bf16.msra.mxu0 0
  %456 = vmatpush.bf16.msra.mxu0 0
  %457 = vmatpush.bf16.msra.mxu0 0
  %458 = vmatpush.bf16.msra.mxu0 0
  %459 = vmatpush.bf16.msra.mxu0 0
  %460 = vmatpush.bf16.msra.mxu0 %v127
  %461 = vmatpush.bf16.msra.mxu0 %v126
  %462 = vmatmul.bf16.gmra.mxu0 %v452
  %v463 = vpop.f32.mrf.mxu0
  %v464 = vadd.f32 0.0, %v463
  %v465 = vpop.f32.mrf.mxu0
  %466 = vdwg.mxu0
  %v467 = vadd.f32 %v446, %v464
  %v468 = vxor.u32 %v467, 2147483648
  %v469 = vmul.f32 %v468, 1.442695
  %v470 = vpow.pop %v469
  %v471 = vadd.f32 %v470, 1.0
  %v472 = vrcp.pop %v471
  %v473 = vmul.f32 %v471, %v472
  %v474 = vsub.f32 1.0, %v473
  %v475 = vmul.f32 %v472, %v474
  %v476 = vadd.f32 %v472, %v475
  %vm477 = vweird.f32 %v471
  %vm478 = vweird.f32 %v472
  %vm479 = vmor %vm477, %vm478
  %v480 = vsel %vm479, %v472, %v476
  %v481 = vand.u32 2147483647, %v471
  %vm482 = vcmp.eq.f32.partialorder %v481, 8.507059e+37
  %v483 = vand.u32 %v471, 2147483648
  %v484 = vor.u32 1.1754944e-38, %v483
  %v485 = vsel %vm482, %v484, %v480
  %v486 = vmul.f32 1.0, %v485
  %v487 = vtanh.pop %v467
  %v488 = vmul.f32 %v486, %v434
  %490 = vrot.lane.b32.xlu0 %v487, 32
  %v491 = vpop.permute.xlu0 %490
  %v493 = vmul.f32 %v486, %v491
  %495 = vrot.lane.b32.xlu0 %v493, 32
  %v496 = vpop.permute.xlu0 %495
  %v498 = vadd.f32 %v488, %v496
  %v499 = vtanh.pop %v498
  %501 = vrot.lane.b32.xlu0 %v499, 32
  %v502 = vpop.permute.xlu0 %501
  %v504 = vmul.f32 %v486, %v502
  %506 = vrot.lane.b32.xlu0 %v504, 64
  %v507 = vpop.permute.xlu0 %506
  %509 = vst.msk [vmem:[#allocation3 + $0x28] sm:$0xff] %vm130, %v507
  %v510 = vld [vmem:[#allocation2 + $0x30] sm:$0xff]
  %v511 = vpack.c.bf16 %v504, %v504
  %513 = vrot.lane.b32.xlu0 %v511, 64
  %v514 = vpop.permute.xlu0 %513
  %v516 = vsel %vm130, %v514, 0
  %518 = vmatpush.bf16.msra.mxu0 0
  %519 = vmatpush.bf16.msra.mxu0 0
  %520 = vmatpush.bf16.msra.mxu0 0
  %521 = vmatpush.bf16.msra.mxu0 0
  %522 = vmatpush.bf16.msra.mxu0 0
  %523 = vmatpush.bf16.msra.mxu0 0
  %524 = vmatpush.bf16.msra.mxu0 %v127
  %525 = vmatpush.bf16.msra.mxu0 %v126
  %526 = vmatmul.bf16.gmra.mxu0 %v516
  %v527 = vpop.f32.mrf.mxu0
  %v528 = vadd.f32 0.0, %v527
  %v529 = vpop.f32.mrf.mxu0
  %530 = vdwg.mxu0
  %v531 = vadd.f32 %v510, %v528
  %v532 = vxor.u32 %v531, 2147483648
  %v533 = vmul.f32 %v532, 1.442695
  %v534 = vpow.pop %v533
  %v535 = vadd.f32 %v534, 1.0
  %v536 = vrcp.pop %v535
  %v537 = vmul.f32 %v535, %v536
  %v538 = vsub.f32 1.0, %v537
  %v539 = vmul.f32 %v536, %v538
  %v540 = vadd.f32 %v536, %v539
  %vm541 = vweird.f32 %v535
  %vm542 = vweird.f32 %v536
  %vm543 = vmor %vm541, %vm542
  %v544 = vsel %vm543, %v536, %v540
  %v545 = vand.u32 2147483647, %v535
  %vm546 = vcmp.eq.f32.partialorder %v545, 8.507059e+37
  %v547 = vand.u32 %v535, 2147483648
  %v548 = vor.u32 1.1754944e-38, %v547
  %v549 = vsel %vm546, %v548, %v544
  %v550 = vmul.f32 1.0, %v549
  %v551 = vtanh.pop %v531
  %v552 = vmul.f32 %v550, %v498
  %554 = vrot.lane.b32.xlu0 %v551, 32
  %v555 = vpop.permute.xlu0 %554
  %v557 = vmul.f32 %v550, %v555
  %559 = vrot.lane.b32.xlu0 %v557, 32
  %v560 = vpop.permute.xlu0 %559
  %v562 = vadd.f32 %v552, %v560
  %v563 = vtanh.pop %v562
  %565 = vrot.lane.b32.xlu0 %v563, 32
  %v566 = vpop.permute.xlu0 %565
  %v568 = vmul.f32 %v550, %v566
  %570 = vrot.lane.b32.xlu0 %v568, 64
  %v571 = vpop.permute.xlu0 %570
  %573 = vst.msk [vmem:[#allocation3 + $0x30] sm:$0xff] %vm130, %v571
  %v574 = vld [vmem:[#allocation2 + $0x38] sm:$0xff]
  %v575 = vpack.c.bf16 %v568, %v568
  %577 = vrot.lane.b32.xlu0 %v575, 64
  %v578 = vpop.permute.xlu0 %577
  %v580 = vsel %vm130, %v578, 0
  %582 = vmatpush.bf16.msra.mxu0 0
  %583 = vmatpush.bf16.msra.mxu0 0
  %584 = vmatpush.bf16.msra.mxu0 0
  %585 = vmatpush.bf16.msra.mxu0 0
  %586 = vmatpush.bf16.msra.mxu0 0
  %587 = vmatpush.bf16.msra.mxu0 0
  %588 = vmatpush.bf16.msra.mxu0 %v127
  %589 = vmatpush.bf16.msra.mxu0 %v126
  %590 = vmatmul.bf16.gmra.mxu0 %v580
  %v591 = vpop.f32.mrf.mxu0
  %v592 = vadd.f32 0.0, %v591
  %v593 = vpop.f32.mrf.mxu0
  %594 = vdwg.mxu0
  %v595 = vadd.f32 %v574, %v592
  %v596 = vxor.u32 %v595, 2147483648
  %v597 = vmul.f32 %v596, 1.442695
  %v598 = vpow.pop %v597
  %v599 = vadd.f32 %v598, 1.0
  %v600 = vrcp.pop %v599
  %v601 = vmul.f32 %v599, %v600
  %v602 = vsub.f32 1.0, %v601
  %v603 = vmul.f32 %v600, %v602
  %v604 = vadd.f32 %v600, %v603
  %vm605 = vweird.f32 %v599
  %vm606 = vweird.f32 %v600
  %vm607 = vmor %vm605, %vm606
  %v608 = vsel %vm607, %v600, %v604
  %v609 = vand.u32 2147483647, %v599
  %vm610 = vcmp.eq.f32.partialorder %v609, 8.507059e+37
  %v611 = vand.u32 %v599, 2147483648
  %v612 = vor.u32 1.1754944e-38, %v611
  %v613 = vsel %vm610, %v612, %v608
  %v614 = vmul.f32 1.0, %v613
  %v615 = vtanh.pop %v595
  %v616 = vmul.f32 %v614, %v562
  %618 = vrot.lane.b32.xlu0 %v615, 32
  %v619 = vpop.permute.xlu0 %618
  %v621 = vmul.f32 %v614, %v619
  %623 = vrot.lane.b32.xlu0 %v621, 32
  %v624 = vpop.permute.xlu0 %623
  %v626 = vadd.f32 %v616, %v624
  %v627 = vtanh.pop %v626
  %629 = vrot.lane.b32.xlu0 %v627, 32
  %v630 = vpop.permute.xlu0 %629
  %v632 = vmul.f32 %v614, %v630
  %634 = vrot.lane.b32.xlu0 %v632, 64
  %v635 = vpop.permute.xlu0 %634
  %637 = vst.msk [vmem:[#allocation3 + $0x38] sm:$0xff] %vm130, %v635
  %v638 = vld [vmem:[#allocation3] sm:$0xff]
  %v639 = vld [vmem:[#allocation3 + $0x8] sm:$0xff]
  %v640 = vld [vmem:[#allocation3 + $0x10] sm:$0xff]
  %v641 = vld [vmem:[#allocation3 + $0x18] sm:$0xff]
  %v642 = vld [vmem:[#allocation3 + $0x20] sm:$0xff]
  %v643 = vld [vmem:[#allocation3 + $0x28] sm:$0xff]
  %v644 = vld [vmem:[#allocation3 + $0x30] sm:$0xff]
  %v645 = vld [vmem:[#allocation3 + $0x38] sm:$0xff]
  %v646 = vpack.c.bf16 %v639, %v638
  %v647 = vpack.c.bf16 %v641, %v640
  %v648 = vpack.c.bf16 %v643, %v642
  %v649 = vpack.c.bf16 %v645, %v644
  %v650 = vld [vmem:[%s4] sm:$0xf]
  %v651 = vld [vmem:[%s4 + $0x4] sm:$0xf]
  %v652 = vld [vmem:[%s4 + $0x8] sm:$0xf]
  %v653 = vld [vmem:[%s4 + $0xc] sm:$0xf]
  %v654 = vld [vmem:[%s5] sm:$0xf]
  %v655 = vld [vmem:[%s5 + $0x4] sm:$0xf]
  %v656 = vld [vmem:[%s5 + $0x8] sm:$0xf]
  %v657 = vld [vmem:[%s5 + $0xc] sm:$0xf]
  %v658 = vld [vmem:[%s6] sm:$0x1]
  %v660 = vperm.slane %v658, 0
  %v666 = vunpack.c.l.b16 %v650
  %v667 = vunpack.c.l.b16 %v651
  %v668 = vunpack.c.l.b16 %v652
  %v669 = vunpack.c.l.b16 %v653
  %v670 = vpack.c.b16 %v667, %v666
  %v671 = vpack.c.b16 %v669, %v668
  %v675 = vsel %vm130, %v646, 0
  %v678 = vsel %vm130, %v647, 0
  %v681 = vsel %vm130, %v648, 0
  %v684 = vsel %vm130, %v649, 0
  %686 = vmatpush.bf16.msra.mxu0 0
  %687 = vmatpush.bf16.msra.mxu0 0
  %688 = vmatpush.bf16.msra.mxu0 0
  %689 = vmatpush.bf16.msra.mxu0 0
  %690 = vmatpush.bf16.msra.mxu0 0
  %691 = vmatpush.bf16.msra.mxu0 0
  %692 = vmatpush.bf16.msra.mxu0 %v671
  %693 = vmatpush.bf16.msra.mxu0 %v670
  %694 = vmatmul.bf16.gmra.mxu0 %v675
  %v695 = vpop.f32.mrf.mxu0
  %v696 = vadd.f32 %v660, %v695
  %v697 = vpop.f32.mrf.mxu0
  %v698 = vadd.f32 %v660, %v697
  %699 = vmatmul.bf16.gmra.mxu0 %v678
  %v700 = vpop.f32.mrf.mxu0
  %v701 = vadd.f32 %v660, %v700
  %v702 = vpop.f32.mrf.mxu0
  %v703 = vadd.f32 %v660, %v702
  %704 = vmatmul.bf16.gmra.mxu0 %v681
  %v705 = vpop.f32.mrf.mxu0
  %v706 = vadd.f32 %v660, %v705
  %v707 = vpop.f32.mrf.mxu0
  %v708 = vadd.f32 %v660, %v707
  %709 = vmatmul.bf16.gmra.mxu0 %v684
  %v710 = vpop.f32.mrf.mxu0
  %v711 = vadd.f32 %v660, %v710
  %v712 = vpop.f32.mrf.mxu0
  %v713 = vadd.f32 %v660, %v712
  %714 = vdwg.mxu0
  %715 = vst [vmem:[#allocation2] sm:$0xff] %v696
  %716 = vst [vmem:[#allocation2 + $0x8] sm:$0xff] %v698
  %717 = vst [vmem:[#allocation2 + $0x10] sm:$0xff] %v701
  %718 = vst [vmem:[#allocation2 + $0x18] sm:$0xff] %v703
  %719 = vst [vmem:[#allocation2 + $0x20] sm:$0xff] %v706
  %720 = vst [vmem:[#allocation2 + $0x28] sm:$0xff] %v708
  %721 = vst [vmem:[#allocation2 + $0x30] sm:$0xff] %v711
  %722 = vst [vmem:[#allocation2 + $0x38] sm:$0xff] %v713
  %v723 = vld [vmem:[#allocation2] sm:$0xff]
  %v728 = vunpack.c.l.b16 %v654
  %v729 = vunpack.c.l.b16 %v655
  %v730 = vunpack.c.l.b16 %v656
  %v731 = vunpack.c.l.b16 %v657
  %v732 = vpack.c.b16 %v729, %v728
  %v733 = vpack.c.b16 %v731, %v730
  %736 = vmatpush.bf16.msra.mxu0 0
  %737 = vmatpush.bf16.msra.mxu0 0
  %738 = vmatpush.bf16.msra.mxu0 0
  %739 = vmatpush.bf16.msra.mxu0 0
  %740 = vmatpush.bf16.msra.mxu0 0
  %741 = vmatpush.bf16.msra.mxu0 0
  %742 = vmatpush.bf16.msra.mxu0 %v733
  %743 = vmatpush.bf16.msra.mxu0 %v732
  %744 = vmatmul.bf16.gmra.mxu0 %v132
  %v745 = vpop.f32.mrf.mxu0
  %v746 = vadd.f32 0.0, %v745
  %v747 = vpop.f32.mrf.mxu0
  %748 = vdwg.mxu0
  %v749 = vadd.f32 %v723, %v746
  %v750 = vxor.u32 %v749, 2147483648
  %v751 = vmul.f32 %v750, 1.442695
  %v752 = vpow.pop %v751
  %v753 = vadd.f32 %v752, 1.0
  %v754 = vrcp.pop %v753
  %v755 = vmul.f32 %v753, %v754
  %v756 = vsub.f32 1.0, %v755
  %v757 = vmul.f32 %v754, %v756
  %v758 = vadd.f32 %v754, %v757
  %vm759 = vweird.f32 %v753
  %vm760 = vweird.f32 %v754
  %vm761 = vmor %vm759, %vm760
  %v762 = vsel %vm761, %v754, %v758
  %v763 = vand.u32 2147483647, %v753
  %vm764 = vcmp.eq.f32.partialorder %v763, 8.507059e+37
  %v765 = vand.u32 %v753, 2147483648
  %v766 = vor.u32 1.1754944e-38, %v765
  %v767 = vsel %vm764, %v766, %v762
  %v768 = vmul.f32 1.0, %v767
  %v769 = vtanh.pop %v749
  %v770 = vmul.f32 %v768, 0.0
  %772 = vrot.lane.b32.xlu0 %v769, 32
  %v773 = vpop.permute.xlu0 %772
  %v775 = vmul.f32 %v768, %v773
  %777 = vrot.lane.b32.xlu0 %v775, 32
  %v778 = vpop.permute.xlu0 %777
  %v780 = vadd.f32 %v770, %v778
  %v781 = vtanh.pop %v780
  %783 = vrot.lane.b32.xlu0 %v781, 32
  %v784 = vpop.permute.xlu0 %783
  %v786 = vmul.f32 %v768, %v784
  %788 = vrot.lane.b32.xlu0 %v786, 64
  %v789 = vpop.permute.xlu0 %788
  %791 = vst.msk [vmem:[#allocation4] sm:$0xff] %vm130, %v789
  %v792 = vld [vmem:[#allocation2 + $0x8] sm:$0xff]
  %v793 = vpack.c.bf16 %v786, %v786
  %795 = vrot.lane.b32.xlu0 %v793, 64
  %v796 = vpop.permute.xlu0 %795
  %v798 = vsel %vm130, %v796, 0
  %800 = vmatpush.bf16.msra.mxu0 0
  %801 = vmatpush.bf16.msra.mxu0 0
  %802 = vmatpush.bf16.msra.mxu0 0
  %803 = vmatpush.bf16.msra.mxu0 0
  %804 = vmatpush.bf16.msra.mxu0 0
  %805 = vmatpush.bf16.msra.mxu0 0
  %806 = vmatpush.bf16.msra.mxu0 %v733
  %807 = vmatpush.bf16.msra.mxu0 %v732
  %808 = vmatmul.bf16.gmra.mxu0 %v798
  %v809 = vpop.f32.mrf.mxu0
  %v810 = vadd.f32 0.0, %v809
  %v811 = vpop.f32.mrf.mxu0
  %812 = vdwg.mxu0
  %v813 = vadd.f32 %v792, %v810
  %v814 = vxor.u32 %v813, 2147483648
  %v815 = vmul.f32 %v814, 1.442695
  %v816 = vpow.pop %v815
  %v817 = vadd.f32 %v816, 1.0
  %v818 = vrcp.pop %v817
  %v819 = vmul.f32 %v817, %v818
  %v820 = vsub.f32 1.0, %v819
  %v821 = vmul.f32 %v818, %v820
  %v822 = vadd.f32 %v818, %v821
  %vm823 = vweird.f32 %v817
  %vm824 = vweird.f32 %v818
  %vm825 = vmor %vm823, %vm824
  %v826 = vsel %vm825, %v818, %v822
  %v827 = vand.u32 2147483647, %v817
  %vm828 = vcmp.eq.f32.partialorder %v827, 8.507059e+37
  %v829 = vand.u32 %v817, 2147483648
  %v830 = vor.u32 1.1754944e-38, %v829
  %v831 = vsel %vm828, %v830, %v826
  %v832 = vmul.f32 1.0, %v831
  %v833 = vtanh.pop %v813
  %v834 = vmul.f32 %v832, %v780
  %836 = vrot.lane.b32.xlu0 %v833, 32
  %v837 = vpop.permute.xlu0 %836
  %v839 = vmul.f32 %v832, %v837
  %841 = vrot.lane.b32.xlu0 %v839, 32
  %v842 = vpop.permute.xlu0 %841
  %v844 = vadd.f32 %v834, %v842
  %v845 = vtanh.pop %v844
  %847 = vrot.lane.b32.xlu0 %v845, 32
  %v848 = vpop.permute.xlu0 %847
  %v850 = vmul.f32 %v832, %v848
  %852 = vrot.lane.b32.xlu0 %v850, 64
  %v853 = vpop.permute.xlu0 %852
  %855 = vst.msk [vmem:[#allocation4 + $0x8] sm:$0xff] %vm130, %v853
  %v856 = vld [vmem:[#allocation2 + $0x10] sm:$0xff]
  %v857 = vpack.c.bf16 %v850, %v850
  %859 = vrot.lane.b32.xlu0 %v857, 64
  %v860 = vpop.permute.xlu0 %859
  %v862 = vsel %vm130, %v860, 0
  %864 = vmatpush.bf16.msra.mxu0 0
  %865 = vmatpush.bf16.msra.mxu0 0
  %866 = vmatpush.bf16.msra.mxu0 0
  %867 = vmatpush.bf16.msra.mxu0 0
  %868 = vmatpush.bf16.msra.mxu0 0
  %869 = vmatpush.bf16.msra.mxu0 0
  %870 = vmatpush.bf16.msra.mxu0 %v733
  %871 = vmatpush.bf16.msra.mxu0 %v732
  %872 = vmatmul.bf16.gmra.mxu0 %v862
  %v873 = vpop.f32.mrf.mxu0
  %v874 = vadd.f32 0.0, %v873
  %v875 = vpop.f32.mrf.mxu0
  %876 = vdwg.mxu0
  %v877 = vadd.f32 %v856, %v874
  %v878 = vxor.u32 %v877, 2147483648
  %v879 = vmul.f32 %v878, 1.442695
  %v880 = vpow.pop %v879
  %v881 = vadd.f32 %v880, 1.0
  %v882 = vrcp.pop %v881
  %v883 = vmul.f32 %v881, %v882
  %v884 = vsub.f32 1.0, %v883
  %v885 = vmul.f32 %v882, %v884
  %v886 = vadd.f32 %v882, %v885
  %vm887 = vweird.f32 %v881
  %vm888 = vweird.f32 %v882
  %vm889 = vmor %vm887, %vm888
  %v890 = vsel %vm889, %v882, %v886
  %v891 = vand.u32 2147483647, %v881
  %vm892 = vcmp.eq.f32.partialorder %v891, 8.507059e+37
  %v893 = vand.u32 %v881, 2147483648
  %v894 = vor.u32 1.1754944e-38, %v893
  %v895 = vsel %vm892, %v894, %v890
  %v896 = vmul.f32 1.0, %v895
  %v897 = vtanh.pop %v877
  %v898 = vmul.f32 %v896, %v844
  %900 = vrot.lane.b32.xlu0 %v897, 32
  %v901 = vpop.permute.xlu0 %900
  %v903 = vmul.f32 %v896, %v901
  %905 = vrot.lane.b32.xlu0 %v903, 32
  %v906 = vpop.permute.xlu0 %905
  %v908 = vadd.f32 %v898, %v906
  %v909 = vtanh.pop %v908
  %911 = vrot.lane.b32.xlu0 %v909, 32
  %v912 = vpop.permute.xlu0 %911
  %v914 = vmul.f32 %v896, %v912
  %916 = vrot.lane.b32.xlu0 %v914, 64
  %v917 = vpop.permute.xlu0 %916
  %919 = vst.msk [vmem:[#allocation4 + $0x10] sm:$0xff] %vm130, %v917
  %v920 = vld [vmem:[#allocation2 + $0x18] sm:$0xff]
  %v921 = vpack.c.bf16 %v914, %v914
  %923 = vrot.lane.b32.xlu0 %v921, 64
  %v924 = vpop.permute.xlu0 %923
  %v926 = vsel %vm130, %v924, 0
  %928 = vmatpush.bf16.msra.mxu0 0
  %929 = vmatpush.bf16.msra.mxu0 0
  %930 = vmatpush.bf16.msra.mxu0 0
  %931 = vmatpush.bf16.msra.mxu0 0
  %932 = vmatpush.bf16.msra.mxu0 0
  %933 = vmatpush.bf16.msra.mxu0 0
  %934 = vmatpush.bf16.msra.mxu0 %v733
  %935 = vmatpush.bf16.msra.mxu0 %v732
  %936 = vmatmul.bf16.gmra.mxu0 %v926
  %v937 = vpop.f32.mrf.mxu0
  %v938 = vadd.f32 0.0, %v937
  %v939 = vpop.f32.mrf.mxu0
  %940 = vdwg.mxu0
  %v941 = vadd.f32 %v920, %v938
  %v942 = vxor.u32 %v941, 2147483648
  %v943 = vmul.f32 %v942, 1.442695
  %v944 = vpow.pop %v943
  %v945 = vadd.f32 %v944, 1.0
  %v946 = vrcp.pop %v945
  %v947 = vmul.f32 %v945, %v946
  %v948 = vsub.f32 1.0, %v947
  %v949 = vmul.f32 %v946, %v948
  %v950 = vadd.f32 %v946, %v949
  %vm951 = vweird.f32 %v945
  %vm952 = vweird.f32 %v946
  %vm953 = vmor %vm951, %vm952
  %v954 = vsel %vm953, %v946, %v950
  %v955 = vand.u32 2147483647, %v945
  %vm956 = vcmp.eq.f32.partialorder %v955, 8.507059e+37
  %v957 = vand.u32 %v945, 2147483648
  %v958 = vor.u32 1.1754944e-38, %v957
  %v959 = vsel %vm956, %v958, %v954
  %v960 = vmul.f32 1.0, %v959
  %v961 = vtanh.pop %v941
  %v962 = vmul.f32 %v960, %v908
  %964 = vrot.lane.b32.xlu0 %v961, 32
  %v965 = vpop.permute.xlu0 %964
  %v967 = vmul.f32 %v960, %v965
  %969 = vrot.lane.b32.xlu0 %v967, 32
  %v970 = vpop.permute.xlu0 %969
  %v972 = vadd.f32 %v962, %v970
  %v973 = vtanh.pop %v972
  %975 = vrot.lane.b32.xlu0 %v973, 32
  %v976 = vpop.permute.xlu0 %975
  %v978 = vmul.f32 %v960, %v976
  %980 = vrot.lane.b32.xlu0 %v978, 64
  %v981 = vpop.permute.xlu0 %980
  %983 = vst.msk [vmem:[#allocation4 + $0x18] sm:$0xff] %vm130, %v981
  %v984 = vld [vmem:[#allocation2 + $0x20] sm:$0xff]
  %v985 = vpack.c.bf16 %v978, %v978
  %987 = vrot.lane.b32.xlu0 %v985, 64
  %v988 = vpop.permute.xlu0 %987
  %v990 = vsel %vm130, %v988, 0
  %992 = vmatpush.bf16.msra.mxu0 0
  %993 = vmatpush.bf16.msra.mxu0 0
  %994 = vmatpush.bf16.msra.mxu0 0
  %995 = vmatpush.bf16.msra.mxu0 0
  %996 = vmatpush.bf16.msra.mxu0 0
  %997 = vmatpush.bf16.msra.mxu0 0
  %998 = vmatpush.bf16.msra.mxu0 %v733
  %999 = vmatpush.bf16.msra.mxu0 %v732
  %1000 = vmatmul.bf16.gmra.mxu0 %v990
  %v1001 = vpop.f32.mrf.mxu0
  %v1002 = vadd.f32 0.0, %v1001
  %v1003 = vpop.f32.mrf.mxu0
  %1004 = vdwg.mxu0
  %v1005 = vadd.f32 %v984, %v1002
  %v1006 = vxor.u32 %v1005, 2147483648
  %v1007 = vmul.f32 %v1006, 1.442695
  %v1008 = vpow.pop %v1007
  %v1009 = vadd.f32 %v1008, 1.0
  %v1010 = vrcp.pop %v1009
  %v1011 = vmul.f32 %v1009, %v1010
  %v1012 = vsub.f32 1.0, %v1011
  %v1013 = vmul.f32 %v1010, %v1012
  %v1014 = vadd.f32 %v1010, %v1013
  %vm1015 = vweird.f32 %v1009
  %vm1016 = vweird.f32 %v1010
  %vm1017 = vmor %vm1015, %vm1016
  %v1018 = vsel %vm1017, %v1010, %v1014
  %v1019 = vand.u32 2147483647, %v1009
  %vm1020 = vcmp.eq.f32.partialorder %v1019, 8.507059e+37
  %v1021 = vand.u32 %v1009, 2147483648
  %v1022 = vor.u32 1.1754944e-38, %v1021
  %v1023 = vsel %vm1020, %v1022, %v1018
  %v1024 = vmul.f32 1.0, %v1023
  %v1025 = vtanh.pop %v1005
  %v1026 = vmul.f32 %v1024, %v972
  %1028 = vrot.lane.b32.xlu0 %v1025, 32
  %v1029 = vpop.permute.xlu0 %1028
  %v1031 = vmul.f32 %v1024, %v1029
  %1033 = vrot.lane.b32.xlu0 %v1031, 32
  %v1034 = vpop.permute.xlu0 %1033
  %v1036 = vadd.f32 %v1026, %v1034
  %v1037 = vtanh.pop %v1036
  %1039 = vrot.lane.b32.xlu0 %v1037, 32
  %v1040 = vpop.permute.xlu0 %1039
  %v1042 = vmul.f32 %v1024, %v1040
  %1044 = vrot.lane.b32.xlu0 %v1042, 64
  %v1045 = vpop.permute.xlu0 %1044
  %1047 = vst.msk [vmem:[#allocation4 + $0x20] sm:$0xff] %vm130, %v1045
  %v1048 = vld [vmem:[#allocation2 + $0x28] sm:$0xff]
  %v1049 = vpack.c.bf16 %v1042, %v1042
  %1051 = vrot.lane.b32.xlu0 %v1049, 64
  %v1052 = vpop.permute.xlu0 %1051
  %v1054 = vsel %vm130, %v1052, 0
  %1056 = vmatpush.bf16.msra.mxu0 0
  %1057 = vmatpush.bf16.msra.mxu0 0
  %1058 = vmatpush.bf16.msra.mxu0 0
  %1059 = vmatpush.bf16.msra.mxu0 0
  %1060 = vmatpush.bf16.msra.mxu0 0
  %1061 = vmatpush.bf16.msra.mxu0 0
  %1062 = vmatpush.bf16.msra.mxu0 %v733
  %1063 = vmatpush.bf16.msra.mxu0 %v732
  %1064 = vmatmul.bf16.gmra.mxu0 %v1054
  %v1065 = vpop.f32.mrf.mxu0
  %v1066 = vadd.f32 0.0, %v1065
  %v1067 = vpop.f32.mrf.mxu0
  %1068 = vdwg.mxu0
  %v1069 = vadd.f32 %v1048, %v1066
  %v1070 = vxor.u32 %v1069, 2147483648
  %v1071 = vmul.f32 %v1070, 1.442695
  %v1072 = vpow.pop %v1071
  %v1073 = vadd.f32 %v1072, 1.0
  %v1074 = vrcp.pop %v1073
  %v1075 = vmul.f32 %v1073, %v1074
  %v1076 = vsub.f32 1.0, %v1075
  %v1077 = vmul.f32 %v1074, %v1076
  %v1078 = vadd.f32 %v1074, %v1077
  %vm1079 = vweird.f32 %v1073
  %vm1080 = vweird.f32 %v1074
  %vm1081 = vmor %vm1079, %vm1080
  %v1082 = vsel %vm1081, %v1074, %v1078
  %v1083 = vand.u32 2147483647, %v1073
  %vm1084 = vcmp.eq.f32.partialorder %v1083, 8.507059e+37
  %v1085 = vand.u32 %v1073, 2147483648
  %v1086 = vor.u32 1.1754944e-38, %v1085
  %v1087 = vsel %vm1084, %v1086, %v1082
  %v1088 = vmul.f32 1.0, %v1087
  %v1089 = vtanh.pop %v1069
  %v1090 = vmul.f32 %v1088, %v1036
  %1092 = vrot.lane.b32.xlu0 %v1089, 32
  %v1093 = vpop.permute.xlu0 %1092
  %v1095 = vmul.f32 %v1088, %v1093
  %1097 = vrot.lane.b32.xlu0 %v1095, 32
  %v1098 = vpop.permute.xlu0 %1097
  %v1100 = vadd.f32 %v1090, %v1098
  %v1101 = vtanh.pop %v1100
  %1103 = vrot.lane.b32.xlu0 %v1101, 32
  %v1104 = vpop.permute.xlu0 %1103
  %v1106 = vmul.f32 %v1088, %v1104
  %1108 = vrot.lane.b32.xlu0 %v1106, 64
  %v1109 = vpop.permute.xlu0 %1108
  %1111 = vst.msk [vmem:[#allocation4 + $0x28] sm:$0xff] %vm130, %v1109
  %v1112 = vld [vmem:[#allocation2 + $0x30] sm:$0xff]
  %v1113 = vpack.c.bf16 %v1106, %v1106
  %1115 = vrot.lane.b32.xlu0 %v1113, 64
  %v1116 = vpop.permute.xlu0 %1115
  %v1118 = vsel %vm130, %v1116, 0
  %1120 = vmatpush.bf16.msra.mxu0 0
  %1121 = vmatpush.bf16.msra.mxu0 0
  %1122 = vmatpush.bf16.msra.mxu0 0
  %1123 = vmatpush.bf16.msra.mxu0 0
  %1124 = vmatpush.bf16.msra.mxu0 0
  %1125 = vmatpush.bf16.msra.mxu0 0
  %1126 = vmatpush.bf16.msra.mxu0 %v733
  %1127 = vmatpush.bf16.msra.mxu0 %v732
  %1128 = vmatmul.bf16.gmra.mxu0 %v1118
  %v1129 = vpop.f32.mrf.mxu0
  %v1130 = vadd.f32 0.0, %v1129
  %v1131 = vpop.f32.mrf.mxu0
  %1132 = vdwg.mxu0
  %v1133 = vadd.f32 %v1112, %v1130
  %v1134 = vxor.u32 %v1133, 2147483648
  %v1135 = vmul.f32 %v1134, 1.442695
  %v1136 = vpow.pop %v1135
  %v1137 = vadd.f32 %v1136, 1.0
  %v1138 = vrcp.pop %v1137
  %v1139 = vmul.f32 %v1137, %v1138
  %v1140 = vsub.f32 1.0, %v1139
  %v1141 = vmul.f32 %v1138, %v1140
  %v1142 = vadd.f32 %v1138, %v1141
  %vm1143 = vweird.f32 %v1137
  %vm1144 = vweird.f32 %v1138
  %vm1145 = vmor %vm1143, %vm1144
  %v1146 = vsel %vm1145, %v1138, %v1142
  %v1147 = vand.u32 2147483647, %v1137
  %vm1148 = vcmp.eq.f32.partialorder %v1147, 8.507059e+37
  %v1149 = vand.u32 %v1137, 2147483648
  %v1150 = vor.u32 1.1754944e-38, %v1149
  %v1151 = vsel %vm1148, %v1150, %v1146
  %v1152 = vmul.f32 1.0, %v1151
  %v1153 = vtanh.pop %v1133
  %v1154 = vmul.f32 %v1152, %v1100
  %1156 = vrot.lane.b32.xlu0 %v1153, 32
  %v1157 = vpop.permute.xlu0 %1156
  %v1159 = vmul.f32 %v1152, %v1157
  %1161 = vrot.lane.b32.xlu0 %v1159, 32
  %v1162 = vpop.permute.xlu0 %1161
  %v1164 = vadd.f32 %v1154, %v1162
  %v1165 = vtanh.pop %v1164
  %1167 = vrot.lane.b32.xlu0 %v1165, 32
  %v1168 = vpop.permute.xlu0 %1167
  %v1170 = vmul.f32 %v1152, %v1168
  %1172 = vrot.lane.b32.xlu0 %v1170, 64
  %v1173 = vpop.permute.xlu0 %1172
  %1175 = vst.msk [vmem:[#allocation4 + $0x30] sm:$0xff] %vm130, %v1173
  %v1176 = vld [vmem:[#allocation2 + $0x38] sm:$0xff]
  %v1177 = vpack.c.bf16 %v1170, %v1170
  %1179 = vrot.lane.b32.xlu0 %v1177, 64
  %v1180 = vpop.permute.xlu0 %1179
  %v1182 = vsel %vm130, %v1180, 0
  %1184 = vmatpush.bf16.msra.mxu0 0
  %1185 = vmatpush.bf16.msra.mxu0 0
  %1186 = vmatpush.bf16.msra.mxu0 0
  %1187 = vmatpush.bf16.msra.mxu0 0
  %1188 = vmatpush.bf16.msra.mxu0 0
  %1189 = vmatpush.bf16.msra.mxu0 0
  %1190 = vmatpush.bf16.msra.mxu0 %v733
  %1191 = vmatpush.bf16.msra.mxu0 %v732
  %1192 = vmatmul.bf16.gmra.mxu0 %v1182
  %v1193 = vpop.f32.mrf.mxu0
  %v1194 = vadd.f32 0.0, %v1193
  %v1195 = vpop.f32.mrf.mxu0
  %1196 = vdwg.mxu0
  %v1197 = vadd.f32 %v1176, %v1194
  %v1198 = vxor.u32 %v1197, 2147483648
  %v1199 = vmul.f32 %v1198, 1.442695
  %v1200 = vpow.pop %v1199
  %v1201 = vadd.f32 %v1200, 1.0
  %v1202 = vrcp.pop %v1201
  %v1203 = vmul.f32 %v1201, %v1202
  %v1204 = vsub.f32 1.0, %v1203
  %v1205 = vmul.f32 %v1202, %v1204
  %v1206 = vadd.f32 %v1202, %v1205
  %vm1207 = vweird.f32 %v1201
  %vm1208 = vweird.f32 %v1202
  %vm1209 = vmor %vm1207, %vm1208
  %v1210 = vsel %vm1209, %v1202, %v1206
  %v1211 = vand.u32 2147483647, %v1201
  %vm1212 = vcmp.eq.f32.partialorder %v1211, 8.507059e+37
  %v1213 = vand.u32 %v1201, 2147483648
  %v1214 = vor.u32 1.1754944e-38, %v1213
  %v1215 = vsel %vm1212, %v1214, %v1210
  %v1216 = vmul.f32 1.0, %v1215
  %v1217 = vtanh.pop %v1197
  %v1218 = vmul.f32 %v1216, %v1164
  %1220 = vrot.lane.b32.xlu0 %v1217, 32
  %v1221 = vpop.permute.xlu0 %1220
  %v1223 = vmul.f32 %v1216, %v1221
  %1225 = vrot.lane.b32.xlu0 %v1223, 32
  %v1226 = vpop.permute.xlu0 %1225
  %v1228 = vadd.f32 %v1218, %v1226
  %v1229 = vtanh.pop %v1228
  %1231 = vrot.lane.b32.xlu0 %v1229, 32
  %v1232 = vpop.permute.xlu0 %1231
  %v1234 = vmul.f32 %v1216, %v1232
  %1236 = vrot.lane.b32.xlu0 %v1234, 64
  %v1237 = vpop.permute.xlu0 %1236
  %1239 = vst.msk [vmem:[#allocation4 + $0x38] sm:$0xff] %vm130, %v1237
  %v1240 = vld [vmem:[#allocation4] sm:$0xff]
  %v1241 = vld [vmem:[#allocation4 + $0x8] sm:$0xff]
  %v1242 = vld [vmem:[#allocation4 + $0x10] sm:$0xff]
  %v1243 = vld [vmem:[#allocation4 + $0x18] sm:$0xff]
  %v1244 = vld [vmem:[#allocation4 + $0x20] sm:$0xff]
  %v1245 = vld [vmem:[#allocation4 + $0x28] sm:$0xff]
  %v1246 = vld [vmem:[#allocation4 + $0x30] sm:$0xff]
  %v1247 = vld [vmem:[#allocation4 + $0x38] sm:$0xff]
  %v1248 = vpack.c.bf16 %v1241, %v1240
  %v1249 = vpack.c.bf16 %v1243, %v1242
  %v1250 = vpack.c.bf16 %v1245, %v1244
  %v1251 = vpack.c.bf16 %v1247, %v1246
  %v1252 = vld [vmem:[%s7] sm:$0xf]
  %v1253 = vld [vmem:[%s7 + $0x4] sm:$0xf]
  %v1254 = vld [vmem:[%s7 + $0x8] sm:$0xf]
  %v1255 = vld [vmem:[%s7 + $0xc] sm:$0xf]
  %v1256 = vld [vmem:[%s8] sm:$0xf]
  %v1257 = vld [vmem:[%s8 + $0x4] sm:$0xf]
  %v1258 = vld [vmem:[%s8 + $0x8] sm:$0xf]
  %v1259 = vld [vmem:[%s8 + $0xc] sm:$0xf]
  %v1260 = vld [vmem:[%s9] sm:$0x1]
  %v1262 = vperm.slane %v1260, 0
  %v1268 = vunpack.c.l.b16 %v1252
  %v1269 = vunpack.c.l.b16 %v1253
  %v1270 = vunpack.c.l.b16 %v1254
  %v1271 = vunpack.c.l.b16 %v1255
  %v1272 = vpack.c.b16 %v1269, %v1268
  %v1273 = vpack.c.b16 %v1271, %v1270
  %v1277 = vsel %vm130, %v1248, 0
  %v1280 = vsel %vm130, %v1249, 0
  %v1283 = vsel %vm130, %v1250, 0
  %v1286 = vsel %vm130, %v1251, 0
  %1288 = vmatpush.bf16.msra.mxu0 0
  %1289 = vmatpush.bf16.msra.mxu0 0
  %1290 = vmatpush.bf16.msra.mxu0 0
  %1291 = vmatpush.bf16.msra.mxu0 0
  %1292 = vmatpush.bf16.msra.mxu0 0
  %1293 = vmatpush.bf16.msra.mxu0 0
  %1294 = vmatpush.bf16.msra.mxu0 %v1273
  %1295 = vmatpush.bf16.msra.mxu0 %v1272
  %1296 = vmatmul.bf16.gmra.mxu0 %v1277
  %v1297 = vpop.f32.mrf.mxu0
  %v1298 = vadd.f32 %v1262, %v1297
  %v1299 = vpop.f32.mrf.mxu0
  %v1300 = vadd.f32 %v1262, %v1299
  %1301 = vmatmul.bf16.gmra.mxu0 %v1280
  %v1302 = vpop.f32.mrf.mxu0
  %v1303 = vadd.f32 %v1262, %v1302
  %v1304 = vpop.f32.mrf.mxu0
  %v1305 = vadd.f32 %v1262, %v1304
  %1306 = vmatmul.bf16.gmra.mxu0 %v1283
  %v1307 = vpop.f32.mrf.mxu0
  %v1308 = vadd.f32 %v1262, %v1307
  %v1309 = vpop.f32.mrf.mxu0
  %v1310 = vadd.f32 %v1262, %v1309
  %1311 = vmatmul.bf16.gmra.mxu0 %v1286
  %v1312 = vpop.f32.mrf.mxu0
  %v1313 = vadd.f32 %v1262, %v1312
  %v1314 = vpop.f32.mrf.mxu0
  %v1315 = vadd.f32 %v1262, %v1314
  %1316 = vdwg.mxu0
  %1317 = vst [vmem:[#allocation2] sm:$0xff] %v1298
  %1318 = vst [vmem:[#allocation2 + $0x8] sm:$0xff] %v1300
  %1319 = vst [vmem:[#allocation2 + $0x10] sm:$0xff] %v1303
  %1320 = vst [vmem:[#allocation2 + $0x18] sm:$0xff] %v1305
  %1321 = vst [vmem:[#allocation2 + $0x20] sm:$0xff] %v1308
  %1322 = vst [vmem:[#allocation2 + $0x28] sm:$0xff] %v1310
  %1323 = vst [vmem:[#allocation2 + $0x30] sm:$0xff] %v1313
  %1324 = vst [vmem:[#allocation2 + $0x38] sm:$0xff] %v1315
  %v1325 = vld [vmem:[#allocation2] sm:$0xff]
  %v1330 = vunpack.c.l.b16 %v1256
  %v1331 = vunpack.c.l.b16 %v1257
  %v1332 = vunpack.c.l.b16 %v1258
  %v1333 = vunpack.c.l.b16 %v1259
  %v1334 = vpack.c.b16 %v1331, %v1330
  %v1335 = vpack.c.b16 %v1333, %v1332
  %1338 = vmatpush.bf16.msra.mxu0 0
  %1339 = vmatpush.bf16.msra.mxu0 0
  %1340 = vmatpush.bf16.msra.mxu0 0
  %1341 = vmatpush.bf16.msra.mxu0 0
  %1342 = vmatpush.bf16.msra.mxu0 0
  %1343 = vmatpush.bf16.msra.mxu0 0
  %1344 = vmatpush.bf16.msra.mxu0 %v1335
  %1345 = vmatpush.bf16.msra.mxu0 %v1334
  %1346 = vmatmul.bf16.gmra.mxu0 %v132
  %v1347 = vpop.f32.mrf.mxu0
  %v1348 = vadd.f32 0.0, %v1347
  %v1349 = vpop.f32.mrf.mxu0
  %1350 = vdwg.mxu0
  %v1351 = vadd.f32 %v1325, %v1348
  %v1352 = vxor.u32 %v1351, 2147483648
  %v1353 = vmul.f32 %v1352, 1.442695
  %v1354 = vpow.pop %v1353
  %v1355 = vadd.f32 %v1354, 1.0
  %v1356 = vrcp.pop %v1355
  %v1357 = vmul.f32 %v1355, %v1356
  %v1358 = vsub.f32 1.0, %v1357
  %v1359 = vmul.f32 %v1356, %v1358
  %v1360 = vadd.f32 %v1356, %v1359
  %vm1361 = vweird.f32 %v1355
  %vm1362 = vweird.f32 %v1356
  %vm1363 = vmor %vm1361, %vm1362
  %v1364 = vsel %vm1363, %v1356, %v1360
  %v1365 = vand.u32 2147483647, %v1355
  %vm1366 = vcmp.eq.f32.partialorder %v1365, 8.507059e+37
  %v1367 = vand.u32 %v1355, 2147483648
  %v1368 = vor.u32 1.1754944e-38, %v1367
  %v1369 = vsel %vm1366, %v1368, %v1364
  %v1370 = vmul.f32 1.0, %v1369
  %v1371 = vtanh.pop %v1351
  %v1372 = vmul.f32 %v1370, 0.0
  %1374 = vrot.lane.b32.xlu0 %v1371, 32
  %v1375 = vpop.permute.xlu0 %1374
  %v1377 = vmul.f32 %v1370, %v1375
  %1379 = vrot.lane.b32.xlu0 %v1377, 32
  %v1380 = vpop.permute.xlu0 %1379
  %v1382 = vadd.f32 %v1372, %v1380
  %v1383 = vtanh.pop %v1382
  %1385 = vrot.lane.b32.xlu0 %v1383, 32
  %v1386 = vpop.permute.xlu0 %1385
  %v1388 = vmul.f32 %v1370, %v1386
  %v1389 = vld [vmem:[#allocation2 + $0x8] sm:$0xff]
  %v1390 = vpack.c.bf16 %v1388, %v1388
  %1392 = vrot.lane.b32.xlu0 %v1390, 64
  %v1393 = vpop.permute.xlu0 %1392
  %v1395 = vsel %vm130, %v1393, 0
  %1397 = vmatpush.bf16.msra.mxu0 0
  %1398 = vmatpush.bf16.msra.mxu0 0
  %1399 = vmatpush.bf16.msra.mxu0 0
  %1400 = vmatpush.bf16.msra.mxu0 0
  %1401 = vmatpush.bf16.msra.mxu0 0
  %1402 = vmatpush.bf16.msra.mxu0 0
  %1403 = vmatpush.bf16.msra.mxu0 %v1335
  %1404 = vmatpush.bf16.msra.mxu0 %v1334
  %1405 = vmatmul.bf16.gmra.mxu0 %v1395
  %v1406 = vpop.f32.mrf.mxu0
  %v1407 = vadd.f32 0.0, %v1406
  %v1408 = vpop.f32.mrf.mxu0
  %1409 = vdwg.mxu0
  %v1410 = vadd.f32 %v1389, %v1407
  %v1411 = vxor.u32 %v1410, 2147483648
  %v1412 = vmul.f32 %v1411, 1.442695
  %v1413 = vpow.pop %v1412
  %v1414 = vadd.f32 %v1413, 1.0
  %v1415 = vrcp.pop %v1414
  %v1416 = vmul.f32 %v1414, %v1415
  %v1417 = vsub.f32 1.0, %v1416
  %v1418 = vmul.f32 %v1415, %v1417
  %v1419 = vadd.f32 %v1415, %v1418
  %vm1420 = vweird.f32 %v1414
  %vm1421 = vweird.f32 %v1415
  %vm1422 = vmor %vm1420, %vm1421
  %v1423 = vsel %vm1422, %v1415, %v1419
  %v1424 = vand.u32 2147483647, %v1414
  %vm1425 = vcmp.eq.f32.partialorder %v1424, 8.507059e+37
  %v1426 = vand.u32 %v1414, 2147483648
  %v1427 = vor.u32 1.1754944e-38, %v1426
  %v1428 = vsel %vm1425, %v1427, %v1423
  %v1429 = vmul.f32 1.0, %v1428
  %v1430 = vtanh.pop %v1410
  %v1431 = vmul.f32 %v1429, %v1382
  %1433 = vrot.lane.b32.xlu0 %v1430, 32
  %v1434 = vpop.permute.xlu0 %1433
  %v1436 = vmul.f32 %v1429, %v1434
  %1438 = vrot.lane.b32.xlu0 %v1436, 32
  %v1439 = vpop.permute.xlu0 %1438
  %v1441 = vadd.f32 %v1431, %v1439
  %v1442 = vtanh.pop %v1441
  %1444 = vrot.lane.b32.xlu0 %v1442, 32
  %v1445 = vpop.permute.xlu0 %1444
  %v1447 = vmul.f32 %v1429, %v1445
  %v1448 = vld [vmem:[#allocation2 + $0x10] sm:$0xff]
  %v1449 = vpack.c.bf16 %v1447, %v1447
  %1451 = vrot.lane.b32.xlu0 %v1449, 64
  %v1452 = vpop.permute.xlu0 %1451
  %v1454 = vsel %vm130, %v1452, 0
  %1456 = vmatpush.bf16.msra.mxu0 0
  %1457 = vmatpush.bf16.msra.mxu0 0
  %1458 = vmatpush.bf16.msra.mxu0 0
  %1459 = vmatpush.bf16.msra.mxu0 0
  %1460 = vmatpush.bf16.msra.mxu0 0
  %1461 = vmatpush.bf16.msra.mxu0 0
  %1462 = vmatpush.bf16.msra.mxu0 %v1335
  %1463 = vmatpush.bf16.msra.mxu0 %v1334
  %1464 = vmatmul.bf16.gmra.mxu0 %v1454
  %v1465 = vpop.f32.mrf.mxu0
  %v1466 = vadd.f32 0.0, %v1465
  %v1467 = vpop.f32.mrf.mxu0
  %1468 = vdwg.mxu0
  %v1469 = vadd.f32 %v1448, %v1466
  %v1470 = vxor.u32 %v1469, 2147483648
  %v1471 = vmul.f32 %v1470, 1.442695
  %v1472 = vpow.pop %v1471
  %v1473 = vadd.f32 %v1472, 1.0
  %v1474 = vrcp.pop %v1473
  %v1475 = vmul.f32 %v1473, %v1474
  %v1476 = vsub.f32 1.0, %v1475
  %v1477 = vmul.f32 %v1474, %v1476
  %v1478 = vadd.f32 %v1474, %v1477
  %vm1479 = vweird.f32 %v1473
  %vm1480 = vweird.f32 %v1474
  %vm1481 = vmor %vm1479, %vm1480
  %v1482 = vsel %vm1481, %v1474, %v1478
  %v1483 = vand.u32 2147483647, %v1473
  %vm1484 = vcmp.eq.f32.partialorder %v1483, 8.507059e+37
  %v1485 = vand.u32 %v1473, 2147483648
  %v1486 = vor.u32 1.1754944e-38, %v1485
  %v1487 = vsel %vm1484, %v1486, %v1482
  %v1488 = vmul.f32 1.0, %v1487
  %v1489 = vtanh.pop %v1469
  %v1490 = vmul.f32 %v1488, %v1441
  %1492 = vrot.lane.b32.xlu0 %v1489, 32
  %v1493 = vpop.permute.xlu0 %1492
  %v1495 = vmul.f32 %v1488, %v1493
  %1497 = vrot.lane.b32.xlu0 %v1495, 32
  %v1498 = vpop.permute.xlu0 %1497
  %v1500 = vadd.f32 %v1490, %v1498
  %v1501 = vtanh.pop %v1500
  %1503 = vrot.lane.b32.xlu0 %v1501, 32
  %v1504 = vpop.permute.xlu0 %1503
  %v1506 = vmul.f32 %v1488, %v1504
  %v1507 = vld [vmem:[#allocation2 + $0x18] sm:$0xff]
  %v1508 = vpack.c.bf16 %v1506, %v1506
  %1510 = vrot.lane.b32.xlu0 %v1508, 64
  %v1511 = vpop.permute.xlu0 %1510
  %v1513 = vsel %vm130, %v1511, 0
  %1515 = vmatpush.bf16.msra.mxu0 0
  %1516 = vmatpush.bf16.msra.mxu0 0
  %1517 = vmatpush.bf16.msra.mxu0 0
  %1518 = vmatpush.bf16.msra.mxu0 0
  %1519 = vmatpush.bf16.msra.mxu0 0
  %1520 = vmatpush.bf16.msra.mxu0 0
  %1521 = vmatpush.bf16.msra.mxu0 %v1335
  %1522 = vmatpush.bf16.msra.mxu0 %v1334
  %1523 = vmatmul.bf16.gmra.mxu0 %v1513
  %v1524 = vpop.f32.mrf.mxu0
  %v1525 = vadd.f32 0.0, %v1524
  %v1526 = vpop.f32.mrf.mxu0
  %1527 = vdwg.mxu0
  %v1528 = vadd.f32 %v1507, %v1525
  %v1529 = vxor.u32 %v1528, 2147483648
  %v1530 = vmul.f32 %v1529, 1.442695
  %v1531 = vpow.pop %v1530
  %v1532 = vadd.f32 %v1531, 1.0
  %v1533 = vrcp.pop %v1532
  %v1534 = vmul.f32 %v1532, %v1533
  %v1535 = vsub.f32 1.0, %v1534
  %v1536 = vmul.f32 %v1533, %v1535
  %v1537 = vadd.f32 %v1533, %v1536
  %vm1538 = vweird.f32 %v1532
  %vm1539 = vweird.f32 %v1533
  %vm1540 = vmor %vm1538, %vm1539
  %v1541 = vsel %vm1540, %v1533, %v1537
  %v1542 = vand.u32 2147483647, %v1532
  %vm1543 = vcmp.eq.f32.partialorder %v1542, 8.507059e+37
  %v1544 = vand.u32 %v1532, 2147483648
  %v1545 = vor.u32 1.1754944e-38, %v1544
  %v1546 = vsel %vm1543, %v1545, %v1541
  %v1547 = vmul.f32 1.0, %v1546
  %v1548 = vtanh.pop %v1528
  %v1549 = vmul.f32 %v1547, %v1500
  %1551 = vrot.lane.b32.xlu0 %v1548, 32
  %v1552 = vpop.permute.xlu0 %1551
  %v1554 = vmul.f32 %v1547, %v1552
  %1556 = vrot.lane.b32.xlu0 %v1554, 32
  %v1557 = vpop.permute.xlu0 %1556
  %v1559 = vadd.f32 %v1549, %v1557
  %v1560 = vtanh.pop %v1559
  %1562 = vrot.lane.b32.xlu0 %v1560, 32
  %v1563 = vpop.permute.xlu0 %1562
  %v1565 = vmul.f32 %v1547, %v1563
  %v1566 = vld [vmem:[#allocation2 + $0x20] sm:$0xff]
  %v1567 = vpack.c.bf16 %v1565, %v1565
  %1569 = vrot.lane.b32.xlu0 %v1567, 64
  %v1570 = vpop.permute.xlu0 %1569
  %v1572 = vsel %vm130, %v1570, 0
  %1574 = vmatpush.bf16.msra.mxu0 0
  %1575 = vmatpush.bf16.msra.mxu0 0
  %1576 = vmatpush.bf16.msra.mxu0 0
  %1577 = vmatpush.bf16.msra.mxu0 0
  %1578 = vmatpush.bf16.msra.mxu0 0
  %1579 = vmatpush.bf16.msra.mxu0 0
  %1580 = vmatpush.bf16.msra.mxu0 %v1335
  %1581 = vmatpush.bf16.msra.mxu0 %v1334
  %1582 = vmatmul.bf16.gmra.mxu0 %v1572
  %v1583 = vpop.f32.mrf.mxu0
  %v1584 = vadd.f32 0.0, %v1583
  %v1585 = vpop.f32.mrf.mxu0
  %1586 = vdwg.mxu0
  %v1587 = vadd.f32 %v1566, %v1584
  %v1588 = vxor.u32 %v1587, 2147483648
  %v1589 = vmul.f32 %v1588, 1.442695
  %v1590 = vpow.pop %v1589
  %v1591 = vadd.f32 %v1590, 1.0
  %v1592 = vrcp.pop %v1591
  %v1593 = vmul.f32 %v1591, %v1592
  %v1594 = vsub.f32 1.0, %v1593
  %v1595 = vmul.f32 %v1592, %v1594
  %v1596 = vadd.f32 %v1592, %v1595
  %vm1597 = vweird.f32 %v1591
  %vm1598 = vweird.f32 %v1592
  %vm1599 = vmor %vm1597, %vm1598
  %v1600 = vsel %vm1599, %v1592, %v1596
  %v1601 = vand.u32 2147483647, %v1591
  %vm1602 = vcmp.eq.f32.partialorder %v1601, 8.507059e+37
  %v1603 = vand.u32 %v1591, 2147483648
  %v1604 = vor.u32 1.1754944e-38, %v1603
  %v1605 = vsel %vm1602, %v1604, %v1600
  %v1606 = vmul.f32 1.0, %v1605
  %v1607 = vtanh.pop %v1587
  %v1608 = vmul.f32 %v1606, %v1559
  %1610 = vrot.lane.b32.xlu0 %v1607, 32
  %v1611 = vpop.permute.xlu0 %1610
  %v1613 = vmul.f32 %v1606, %v1611
  %1615 = vrot.lane.b32.xlu0 %v1613, 32
  %v1616 = vpop.permute.xlu0 %1615
  %v1618 = vadd.f32 %v1608, %v1616
  %v1619 = vtanh.pop %v1618
  %1621 = vrot.lane.b32.xlu0 %v1619, 32
  %v1622 = vpop.permute.xlu0 %1621
  %v1624 = vmul.f32 %v1606, %v1622
  %v1625 = vld [vmem:[#allocation2 + $0x28] sm:$0xff]
  %v1626 = vpack.c.bf16 %v1624, %v1624
  %1628 = vrot.lane.b32.xlu0 %v1626, 64
  %v1629 = vpop.permute.xlu0 %1628
  %v1631 = vsel %vm130, %v1629, 0
  %1633 = vmatpush.bf16.msra.mxu0 0
  %1634 = vmatpush.bf16.msra.mxu0 0
  %1635 = vmatpush.bf16.msra.mxu0 0
  %1636 = vmatpush.bf16.msra.mxu0 0
  %1637 = vmatpush.bf16.msra.mxu0 0
  %1638 = vmatpush.bf16.msra.mxu0 0
  %1639 = vmatpush.bf16.msra.mxu0 %v1335
  %1640 = vmatpush.bf16.msra.mxu0 %v1334
  %1641 = vmatmul.bf16.gmra.mxu0 %v1631
  %v1642 = vpop.f32.mrf.mxu0
  %v1643 = vadd.f32 0.0, %v1642
  %v1644 = vpop.f32.mrf.mxu0
  %1645 = vdwg.mxu0
  %v1646 = vadd.f32 %v1625, %v1643
  %v1647 = vxor.u32 %v1646, 2147483648
  %v1648 = vmul.f32 %v1647, 1.442695
  %v1649 = vpow.pop %v1648
  %v1650 = vadd.f32 %v1649, 1.0
  %v1651 = vrcp.pop %v1650
  %v1652 = vmul.f32 %v1650, %v1651
  %v1653 = vsub.f32 1.0, %v1652
  %v1654 = vmul.f32 %v1651, %v1653
  %v1655 = vadd.f32 %v1651, %v1654
  %vm1656 = vweird.f32 %v1650
  %vm1657 = vweird.f32 %v1651
  %vm1658 = vmor %vm1656, %vm1657
  %v1659 = vsel %vm1658, %v1651, %v1655
  %v1660 = vand.u32 2147483647, %v1650
  %vm1661 = vcmp.eq.f32.partialorder %v1660, 8.507059e+37
  %v1662 = vand.u32 %v1650, 2147483648
  %v1663 = vor.u32 1.1754944e-38, %v1662
  %v1664 = vsel %vm1661, %v1663, %v1659
  %v1665 = vmul.f32 1.0, %v1664
  %v1666 = vtanh.pop %v1646
  %v1667 = vmul.f32 %v1665, %v1618
  %1669 = vrot.lane.b32.xlu0 %v1666, 32
  %v1670 = vpop.permute.xlu0 %1669
  %v1672 = vmul.f32 %v1665, %v1670
  %1674 = vrot.lane.b32.xlu0 %v1672, 32
  %v1675 = vpop.permute.xlu0 %1674
  %v1677 = vadd.f32 %v1667, %v1675
  %v1678 = vtanh.pop %v1677
  %1680 = vrot.lane.b32.xlu0 %v1678, 32
  %v1681 = vpop.permute.xlu0 %1680
  %v1683 = vmul.f32 %v1665, %v1681
  %v1684 = vld [vmem:[#allocation2 + $0x30] sm:$0xff]
  %v1685 = vpack.c.bf16 %v1683, %v1683
  %1687 = vrot.lane.b32.xlu0 %v1685, 64
  %v1688 = vpop.permute.xlu0 %1687
  %v1690 = vsel %vm130, %v1688, 0
  %1692 = vmatpush.bf16.msra.mxu0 0
  %1693 = vmatpush.bf16.msra.mxu0 0
  %1694 = vmatpush.bf16.msra.mxu0 0
  %1695 = vmatpush.bf16.msra.mxu0 0
  %1696 = vmatpush.bf16.msra.mxu0 0
  %1697 = vmatpush.bf16.msra.mxu0 0
  %1698 = vmatpush.bf16.msra.mxu0 %v1335
  %1699 = vmatpush.bf16.msra.mxu0 %v1334
  %1700 = vmatmul.bf16.gmra.mxu0 %v1690
  %v1701 = vpop.f32.mrf.mxu0
  %v1702 = vadd.f32 0.0, %v1701
  %v1703 = vpop.f32.mrf.mxu0
  %1704 = vdwg.mxu0
  %v1705 = vadd.f32 %v1684, %v1702
  %v1706 = vxor.u32 %v1705, 2147483648
  %v1707 = vmul.f32 %v1706, 1.442695
  %v1708 = vpow.pop %v1707
  %v1709 = vadd.f32 %v1708, 1.0
  %v1710 = vrcp.pop %v1709
  %v1711 = vmul.f32 %v1709, %v1710
  %v1712 = vsub.f32 1.0, %v1711
  %v1713 = vmul.f32 %v1710, %v1712
  %v1714 = vadd.f32 %v1710, %v1713
  %vm1715 = vweird.f32 %v1709
  %vm1716 = vweird.f32 %v1710
  %vm1717 = vmor %vm1715, %vm1716
  %v1718 = vsel %vm1717, %v1710, %v1714
  %v1719 = vand.u32 2147483647, %v1709
  %vm1720 = vcmp.eq.f32.partialorder %v1719, 8.507059e+37
  %v1721 = vand.u32 %v1709, 2147483648
  %v1722 = vor.u32 1.1754944e-38, %v1721
  %v1723 = vsel %vm1720, %v1722, %v1718
  %v1724 = vmul.f32 1.0, %v1723
  %v1725 = vtanh.pop %v1705
  %v1726 = vmul.f32 %v1724, %v1677
  %1728 = vrot.lane.b32.xlu0 %v1725, 32
  %v1729 = vpop.permute.xlu0 %1728
  %v1731 = vmul.f32 %v1724, %v1729
  %1733 = vrot.lane.b32.xlu0 %v1731, 32
  %v1734 = vpop.permute.xlu0 %1733
  %v1736 = vadd.f32 %v1726, %v1734
  %v1737 = vtanh.pop %v1736
  %1739 = vrot.lane.b32.xlu0 %v1737, 32
  %v1740 = vpop.permute.xlu0 %1739
  %v1742 = vmul.f32 %v1724, %v1740
  %v1743 = vld [vmem:[#allocation2 + $0x38] sm:$0xff]
  %v1744 = vpack.c.bf16 %v1742, %v1742
  %1746 = vrot.lane.b32.xlu0 %v1744, 64
  %v1747 = vpop.permute.xlu0 %1746
  %v1749 = vsel %vm130, %v1747, 0
  %1751 = vmatpush.bf16.msra.mxu0 0
  %1752 = vmatpush.bf16.msra.mxu0 0
  %1753 = vmatpush.bf16.msra.mxu0 0
  %1754 = vmatpush.bf16.msra.mxu0 0
  %1755 = vmatpush.bf16.msra.mxu0 0
  %1756 = vmatpush.bf16.msra.mxu0 0
  %1757 = vmatpush.bf16.msra.mxu0 %v1335
  %1758 = vmatpush.bf16.msra.mxu0 %v1334
  %1759 = vmatmul.bf16.gmra.mxu0 %v1749
  %v1760 = vpop.f32.mrf.mxu0
  %v1761 = vadd.f32 0.0, %v1760
  %v1762 = vpop.f32.mrf.mxu0
  %1763 = vdwg.mxu0
  %v1764 = vadd.f32 %v1743, %v1761
  %v1765 = vxor.u32 %v1764, 2147483648
  %v1766 = vmul.f32 %v1765, 1.442695
  %v1767 = vpow.pop %v1766
  %v1768 = vadd.f32 %v1767, 1.0
  %v1769 = vrcp.pop %v1768
  %v1770 = vmul.f32 %v1768, %v1769
  %v1771 = vsub.f32 1.0, %v1770
  %v1772 = vmul.f32 %v1769, %v1771
  %v1773 = vadd.f32 %v1769, %v1772
  %vm1774 = vweird.f32 %v1768
  %vm1775 = vweird.f32 %v1769
  %vm1776 = vmor %vm1774, %vm1775
  %v1777 = vsel %vm1776, %v1769, %v1773
  %v1778 = vand.u32 2147483647, %v1768
  %vm1779 = vcmp.eq.f32.partialorder %v1778, 8.507059e+37
  %v1780 = vand.u32 %v1768, 2147483648
  %v1781 = vor.u32 1.1754944e-38, %v1780
  %v1782 = vsel %vm1779, %v1781, %v1777
  %v1783 = vmul.f32 1.0, %v1782
  %v1784 = vtanh.pop %v1764
  %v1785 = vmul.f32 %v1783, %v1736
  %1787 = vrot.lane.b32.xlu0 %v1784, 32
  %v1788 = vpop.permute.xlu0 %1787
  %v1790 = vmul.f32 %v1783, %v1788
  %1792 = vrot.lane.b32.xlu0 %v1790, 32
  %v1793 = vpop.permute.xlu0 %1792
  %v1795 = vadd.f32 %v1785, %v1793
  %v1796 = vtanh.pop %v1795
  %1798 = vrot.lane.b32.xlu0 %v1796, 32
  %v1799 = vpop.permute.xlu0 %1798
  %v1801 = vmul.f32 %v1783, %v1799
  %v1802 = vpack.c.bf16 %v1801, %v1801
  %v1803 = vld [vmem:[%s10] sm:$0xf]
  %v1804 = vld [vmem:[%s10 + $0x4] sm:$0xf]
  %v1805 = vld [vmem:[%s10 + $0x8] sm:$0xf]
  %v1806 = vld [vmem:[%s10 + $0xc] sm:$0xf]
  %v1807 = vld [vmem:[%s11] sm:$0x1]
  %v1809 = vperm.slane %v1807, 0
  %1812 = vrot.lane.b32.xlu0 %v1802, 64
  %v1813 = vpop.permute.xlu0 %1812
  %v1818 = vunpack.c.l.b16 %v1803
  %v1819 = vunpack.c.l.b16 %v1804
  %v1820 = vunpack.c.l.b16 %v1805
  %v1821 = vunpack.c.l.b16 %v1806
  %v1822 = vpack.c.b16 %v1819, %v1818
  %v1823 = vpack.c.b16 %v1821, %v1820
  %v1827 = vsel %vm130, %v1813, 0
  %1829 = vmatpush.bf16.msra.mxu0 0
  %1830 = vmatpush.bf16.msra.mxu0 0
  %1831 = vmatpush.bf16.msra.mxu0 0
  %1832 = vmatpush.bf16.msra.mxu0 0
  %1833 = vmatpush.bf16.msra.mxu0 0
  %1834 = vmatpush.bf16.msra.mxu0 0
  %1835 = vmatpush.bf16.msra.mxu0 %v1823
  %1836 = vmatpush.bf16.msra.mxu0 %v1822
  %1837 = vmatmul.bf16.gmra.mxu0 %v1827
  %v1838 = vpop.f32.mrf.mxu0
  %v1839 = vadd.f32 %v1809, %v1838
  %v1840 = vpop.f32.mrf.mxu0
  %1841 = vdwg.mxu0
  %1842 = vst [vmem:[%s12] sm:$0xff] %v1839
  // Predicated region
  $region50: #{encoder_forward.1} parent=0 // pred_check
    _
  $region51: #{encoder_forward.1} parent=0 // pred_check_branch
    %1844 = sbr.rel (0) target = $region53
  $region52: #{encoder_forward.1} parent=0 // pred_region
    _
  $region53: #{encoder_forward.1} parent=0 // pred_fallthru
    _
  // Predicated region
  $region54: #{encoder_forward.1} parent=0 // pred_check
    _
  $region55: #{encoder_forward.1} parent=0 // pred_check_branch
    %1846 = sbr.rel (0) target = $region57
  $region56: #{encoder_forward.1} parent=0 // pred_region
    _
  $region57: #{encoder_forward.1} parent=0 // pred_fallthru
    _

</llo_original>
